<compile_context>
chip_gen: v6e
topology: v6e:2x2x1
jax: 0.10.0
libtpu: 0.0.40
codegen_flags: <defaults>
</compile_context>

<pallas_src>
import math
import functools

import jax
import jax.numpy as jnp
from jax.experimental import pallas as pl
from jax.experimental.pallas import tpu as pltpu


# ------------------------------------------------------------------ fused kernel

def _encoder_layer_kernel(x_ref, wqkv_ref, bqkv_ref, wo_ref, vecs_ref,
                          w1_ref, b1_ref, w2_ref, wdec_ref, bdec_ref,
                          o_ref, x_sc, ctx_sc, *, nhead):
    """One grid step = (batch b, layer l). Residual stream is carried in x_sc."""
    eps = 1e-5
    f32, bf16 = jnp.float32, jnp.bfloat16

    l = pl.program_id(1)
    n_layers = pl.num_programs(1)
    S, D = x_sc.shape
    head_dim = D // nhead
    scale = 1.0 / math.sqrt(head_dim)

    # ---- initialise the residual stream for this batch at layer 0 ----
    @pl.when(l == 0)
    def _init():
        x_sc[...] = x_ref[0].astype(f32)

    x = x_sc[...]                                            # (S, D) f32

    vecs = vecs_ref[0]                                       # (6, D): g1,be1,g2,be2,bo,b2
    g1, be1 = vecs[0:1, :], vecs[1:2, :]
    g2, be2 = vecs[2:3, :], vecs[3:4, :]
    bo, b2 = vecs[4:5, :], vecs[5:6, :]

    # ---- LayerNorm 1 (pre-norm, f32) ----
    mu = jnp.mean(x, axis=-1, keepdims=True)
    var = jnp.mean((x - mu) ** 2, axis=-1, keepdims=True)
    h = (x - mu) * jax.lax.rsqrt(var + eps) * g1 + be1

    # ---- fused QKV projection: one bf16 MXU matmul, f32 accumulation ----
    qkv = jnp.dot(h.astype(bf16), wqkv_ref[0],
                  preferred_element_type=f32) + bqkv_ref[0]   # (S, 3D)

    # ---- per-head attention; contexts written straight into VMEM scratch ----
    for hd in range(nhead):
        c0 = hd * head_dim
        q = qkv[:, c0:c0 + head_dim].astype(bf16)            # (S, head_dim)
        k = qkv[:, D + c0:D + c0 + head_dim].astype(bf16)
        v = qkv[:, 2 * D + c0:2 * D + c0 + head_dim].astype(bf16)
        s = jax.lax.dot_general(q, k, (((1,), (1,)), ((), ())),
                                preferred_element_type=f32) * scale      # (S, S) f32
        s = s - jnp.max(s, axis=-1, keepdims=True)
        p = jnp.exp(s)
        p = p * pl.reciprocal(jnp.sum(p, axis=-1, keepdims=True), approx=True)
        ctx_sc[:, c0:c0 + head_dim] = jnp.dot(p.astype(bf16), v,
                                              preferred_element_type=f32)

    # ---- out-projection + residual 1 ----
    x = x + jnp.dot(ctx_sc[...].astype(bf16), wo_ref[0],
                    preferred_element_type=f32) + bo

    # ---- LayerNorm 2 (pre-norm) + FFN (ReLU) + residual 2 ----
    mu2 = jnp.mean(x, axis=-1, keepdims=True)
    var2 = jnp.mean((x - mu2) ** 2, axis=-1, keepdims=True)
    h2 = (x - mu2) * jax.lax.rsqrt(var2 + eps) * g2 + be2
    ff = jnp.maximum(jnp.dot(h2.astype(bf16), w1_ref[0],
                             preferred_element_type=f32) + b1_ref[0], 0.0)
    ff = jnp.dot(ff.astype(bf16), w2_ref[0], preferred_element_type=f32) + b2
    x_sc[...] = x + ff

    # ---- final Linear decoder (lane-dense padded output), only after last layer ----
    @pl.when(l == n_layers - 1)
    def _decode():
        xf = x_sc[...]
        out = jnp.dot(xf.astype(bf16), wdec_ref[...],
                      preferred_element_type=f32) + bdec_ref[...]
        o_ref[0] = out.astype(o_ref.dtype)


# ------------------------------------------------------------------ cost / VMEM helpers

def _cost_estimate(B, S, D, d_hid, out_pad, nlayers, nhead):
    per_layer_flops = (2 * S * D * 3 * D          # fused QKV projection
                       + 2 * S * S * D            # Q @ K^T (all heads)
                       + 2 * S * S * D            # P @ V  (all heads)
                       + 2 * S * D * D            # out projection
                       + 2 * S * D * d_hid        # FFN up
                       + 2 * S * d_hid * D)       # FFN down
    flops = B * (nlayers * per_layer_flops + 2 * S * D * out_pad)
    transcendentals = B * nlayers * (nhead * S * S + 4 * S)
    layer_w_bytes = 2 * (D * 3 * D + D * D + D * d_hid + d_hid * D) \
        + 4 * (3 * D + d_hid + 6 * D)
    bytes_accessed = (B * S * D * 4 + B * S * out_pad * 4
                      + B * nlayers * layer_w_bytes
                      + D * out_pad * 2 + out_pad * 4)
    return pl.CostEstimate(flops=int(flops),
                           transcendentals=int(transcendentals),
                           bytes_accessed=int(bytes_accessed))


def _vmem_limit_bytes(S, D, d_hid, out_pad):
    layer_w = 2 * (D * 3 * D + D * D + D * d_hid + d_hid * D) \
        + 4 * (3 * D + d_hid + 6 * D)
    need = (2 * layer_w                          # double-buffered per-layer weights
            + D * out_pad * 2 + out_pad * 4      # decoder weights (resident)
            + 2 * 2 * S * D * 4                  # x block (double-buffered)
            + 2 * S * out_pad * 4                # output block (double-buffered)
            + 2 * S * D * 4                      # residual + ctx scratch
            + S * (3 * D + d_hid + 2 * D) * 4)   # live intermediates
    return int(min(max(4 * need, 16 << 20), 48 << 20))


# ------------------------------------------------------------------ pallas wrapper

def fused_transformer(x3d, params, *, nhead):
    """x3d: (B, S, D) f32 -> (B, S, out_pad) f32 (decoder output, lane-padded)."""
    B, S, D = x3d.shape
    nlayers = params["wqkv"].shape[0]
    d_hid = params["w1"].shape[-1]
    out_pad = params["wdec"].shape[-1]

    def layer_spec(arr):
        n_trailing = arr.ndim - 1

        def idx(b, l):
            return (l,) + (0,) * n_trailing

        return pl.BlockSpec((1,) + tuple(arr.shape[1:]), idx)

    in_specs = [
        pl.BlockSpec((1, S, D), lambda b, l: (b, 0, 0)),          # x (per-batch block)
        layer_spec(params["wqkv"]),
        layer_spec(params["bqkv"]),
        layer_spec(params["wo"]),
        layer_spec(params["vecs"]),
        layer_spec(params["w1"]),
        layer_spec(params["b1"]),
        layer_spec(params["w2"]),
        pl.BlockSpec(params["wdec"].shape, lambda b, l: (0, 0)),  # decoder (resident)
        pl.BlockSpec(params["bdec"].shape, lambda b, l: (0, 0)),
    ]
    out_specs = pl.BlockSpec((1, S, out_pad), lambda b, l: (b, 0, 0))

    kernel = functools.partial(_encoder_layer_kernel, nhead=nhead)

    return pl.pallas_call(
        kernel,
        out_shape=jax.ShapeDtypeStruct((B, S, out_pad), jnp.float32),
        grid_spec=pltpu.PrefetchScalarGridSpec(
            num_scalar_prefetch=0,
            grid=(B, nlayers),
            in_specs=in_specs,
            out_specs=out_specs,
            scratch_shapes=[pltpu.VMEM((S, D), jnp.float32),      # residual stream
                            pltpu.VMEM((S, D), jnp.float32)]),    # attention context
        compiler_params=pltpu.CompilerParams(
            dimension_semantics=("parallel", "arbitrary"),
            vmem_limit_bytes=_vmem_limit_bytes(S, D, d_hid, out_pad)),
        cost_estimate=_cost_estimate(B, S, D, d_hid, out_pad, nlayers, nhead),
    )(x3d, params["wqkv"], params["bqkv"], params["wo"], params["vecs"],
      params["w1"], params["b1"], params["w2"], params["wdec"], params["bdec"])


# ------------------------------------------------------------------ model pieces

def build_pe(max_len, d_model):
    position = jnp.arange(max_len, dtype=jnp.float32)[:, None]
    div_term = jnp.exp(jnp.arange(0, d_model, 2, dtype=jnp.float32)
                       * (-math.log(10000.0) / d_model))
    pe_even = jnp.sin(position * div_term)
    pe_odd = jnp.cos(position * div_term)
    pe = jnp.stack([pe_even, pe_odd], axis=-1).reshape(max_len, d_model)
    return pe[:, None, :]                                         # (max_len, 1, d_model)


def init_params(key, d_model, nhead, d_hid, nlayers, out_size, out_pad):
    bf16 = jnp.bfloat16

    def u(k, shape, bound):
        return jax.random.uniform(k, shape, jnp.float32, -bound, bound)

    lim_a = math.sqrt(6.0 / (2.0 * d_model))                      # xavier-ish attention
    lim_o = 1.0 / math.sqrt(d_model)
    lim_f = 1.0 / math.sqrt(d_hid)

    wqkv, bqkv, wo, vecs, w1, b1, w2 = [], [], [], [], [], [], []
    for _ in range(nlayers):
        key, k1, k2, k3, k4, k5, k6 = jax.random.split(key, 7)
        wqkv.append(u(k1, (d_model, 3 * d_model), lim_a))          # pre-T: h @ Wqkv
        bqkv.append(jnp.zeros((1, 3 * d_model), jnp.float32))
        wo.append(u(k2, (d_model, d_model), lim_o))                # out_proj, pre-T
        vecs.append(jnp.stack([jnp.ones((d_model,), jnp.float32),  # g1
                               jnp.zeros((d_model,), jnp.float32),  # be1
                               jnp.ones((d_model,), jnp.float32),   # g2
                               jnp.zeros((d_model,), jnp.float32),  # be2
                               jnp.zeros((d_model,), jnp.float32),  # bo
                               u(k6, (d_model,), lim_f)], axis=0))  # b2
        w1.append(u(k3, (d_model, d_hid), lim_o))
        b1.append(u(k4, (1, d_hid), lim_o))
        w2.append(u(k5, (d_hid, d_model), lim_f))
    key, kd = jax.random.split(key)
    wdec = jnp.zeros((d_model, out_pad), jnp.float32)
    wdec = wdec.at[:, :out_size].set(
        jax.random.uniform(kd, (d_model, out_size), jnp.float32, -0.1, 0.1))
    return dict(
        wqkv=jnp.stack(wqkv).astype(bf16),
        bqkv=jnp.stack(bqkv),
        wo=jnp.stack(wo).astype(bf16),
        vecs=jnp.stack(vecs),
        w1=jnp.stack(w1).astype(bf16),
        b1=jnp.stack(b1),
        w2=jnp.stack(w2).astype(bf16),
        wdec=wdec.astype(bf16),                                   # lane-padded decoder
        bdec=jnp.zeros((1, out_pad), jnp.float32),                # init_weights(): zero bias
    )


def transformer_forward(face_feat, vid_feat, params, pe, *, nhead, out_size):
    """face_feat: (S_f, B, D), vid_feat: (S_v, B, D) -> (S_f+S_v, B, out_size)."""
    S_f, B, D = face_feat.shape
    S_v = vid_feat.shape[0]
    enc_vid = vid_feat + pe[:S_v].astype(vid_feat.dtype)          # PositionalEncoding2 (eval)
    src = jnp.concatenate([face_feat, enc_vid], axis=0)           # (S, B, D)
    x3d = jnp.transpose(src, (1, 0, 2))                           # (B, S, D) batch-major
    out_pad3d = fused_transformer(x3d, params, nhead=nhead)       # (B, S, out_pad)
    out = out_pad3d[:, :, :out_size]
    return jnp.transpose(out, (1, 0, 2))                          # (S, B, out_size)


# ------------------------------------------------------------------ pure-JAX reference
# Mirrors the kernel's numeric policy (bf16 matmul operands, f32 accumulation, f32
# LayerNorm/softmax) so the comparison isolates the Pallas machinery.

def _ref_forward(face_feat, vid_feat, params, pe, nhead, out_size):
    S_v, B, D = vid_feat.shape
    nlayers = params["wqkv"].shape[0]
    head_dim = D // nhead
    eps = 1e-5
    f32, bf16 = jnp.float32, jnp.bfloat16

    def mm(a, w):
        return jnp.einsum("...ij,jk->...ik", a.astype(bf16), w.astype(bf16),
                          preferred_element_type=f32)

    src = jnp.concatenate([face_feat, vid_feat + pe[:S_v]], axis=0)
    x = jnp.transpose(src, (1, 0, 2)).astype(f32)                 # (B, S, D)
    S = x.shape[1]
    for l in range(nlayers):
        v_ = params["vecs"][l]
        g1, be1, g2, be2, bo, b2 = (v_[i] for i in range(6))
        mu = x.mean(-1, keepdims=True)
        var = ((x - mu) ** 2).mean(-1, keepdims=True)
        h = (x - mu) / jnp.sqrt(var + eps) * g1 + be1
        qkv = mm(h, params["wqkv"][l]) + params["bqkv"][l]        # (B, S, 3D)
        q = qkv[..., :D].reshape(B, S, nhead, head_dim)
        k = qkv[..., D:2 * D].reshape(B, S, nhead, head_dim)
        v = qkv[..., 2 * D:].reshape(B, S, nhead, head_dim)
        s = jnp.einsum("bqhd,bkhd->bhqk", q.astype(bf16), k.astype(bf16),
                       preferred_element_type=f32) / math.sqrt(head_dim)
        p = jax.nn.softmax(s, axis=-1)
        ctx = jnp.einsum("bhqk,bkhd->bqhd", p.astype(bf16), v.astype(bf16),
                         preferred_element_type=f32).reshape(B, S, D)
        x = x + mm(ctx, params["wo"][l]) + bo
        mu2 = x.mean(-1, keepdims=True)
        var2 = ((x - mu2) ** 2).mean(-1, keepdims=True)
        h2 = (x - mu2) / jnp.sqrt(var2 + eps) * g2 + be2
        ff = jnp.maximum(mm(h2, params["w1"][l]) + params["b1"][l], 0.0)
        x = x + mm(ff, params["w2"][l]) + b2
    out = mm(x, params["wdec"]) + params["bdec"]
    return jnp.transpose(out[..., :out_size], (1, 0, 2))


# ------------------------------------------------------------------ main

if __name__ == "__main__":
    out_size, d_model, nhead, d_hid, nlayers = 8, 32, 4, 64, 2
    B, S_face, S_vid = 2, 4, 12
    OUT_PAD = 128                                                  # lane-dense decoder store

    key = jax.random.PRNGKey(0)
    k_face, k_vid, k_params = jax.random.split(key, 3)
    face_feat = jax.random.normal(k_face, (S_face, B, d_model), jnp.float32)
    vid_feat = jax.random.normal(k_vid, (S_vid, B, d_model), jnp.float32)

    params = init_params(k_params, d_model, nhead, d_hid, nlayers, out_size, OUT_PAD)
    pe = build_pe(1500, d_model)

    fwd = jax.jit(functools.partial(transformer_forward, nhead=nhead, out_size=out_size))
    out = jax.block_until_ready(fwd(face_feat, vid_feat, params, pe))
    assert out.shape == (S_face + S_vid, B, out_size)

    ref = _ref_forward(face_feat, vid_feat, params, pe, nhead, out_size)
    # bf16 matmul inputs (mirrored in the reference) + approx softmax reciprocal.
    assert jnp.allclose(out, ref, atol=1e-2, rtol=1e-2), "mismatch vs pure-JAX reference"

    print("KERNEL_OK")
</pallas_src>

<mosaic_0001>
module attributes {stable_mosaic.version = 11 : i64} {
  func.func @_encoder_layer_kernel(%arg0: i32, %arg1: i32, %arg2: memref<1x16x32xf32, #tpu.memory_space<vmem>>, %arg3: memref<1x32x96xbf16, #tpu.memory_space<vmem>>, %arg4: memref<1x1x96xf32, #tpu.memory_space<vmem>>, %arg5: memref<1x32x32xbf16, #tpu.memory_space<vmem>>, %arg6: memref<1x6x32xf32, #tpu.memory_space<vmem>>, %arg7: memref<1x32x64xbf16, #tpu.memory_space<vmem>>, %arg8: memref<1x1x64xf32, #tpu.memory_space<vmem>>, %arg9: memref<1x64x32xbf16, #tpu.memory_space<vmem>>, %arg10: memref<32x128xbf16, #tpu.memory_space<vmem>>, %arg11: memref<1x128xf32, #tpu.memory_space<vmem>>, %arg12: memref<1x16x128xf32, #tpu.memory_space<vmem>>, %arg13: memref<16x32xf32, #tpu.memory_space<vmem>>, %arg14: memref<16x32xf32, #tpu.memory_space<vmem>>) attributes {dimension_semantics = [#tpu.dimension_semantics<parallel>, #tpu.dimension_semantics<arbitrary>], iteration_bounds = array<i64: 2, 2>, scalar_prefetch = 0 : i64, scratch_operands = 2 : i64, tpu.core_type = #tpu.core_type<tc>, window_params = [{transform_indices = @transform_0, window_bounds = array<i64: 1, 16, 32>}, {transform_indices = @transform_1, window_bounds = array<i64: 1, 32, 96>}, {transform_indices = @transform_2, window_bounds = array<i64: 1, 1, 96>}, {transform_indices = @transform_3, window_bounds = array<i64: 1, 32, 32>}, {transform_indices = @transform_4, window_bounds = array<i64: 1, 6, 32>}, {transform_indices = @transform_5, window_bounds = array<i64: 1, 32, 64>}, {transform_indices = @transform_6, window_bounds = array<i64: 1, 1, 64>}, {transform_indices = @transform_7, window_bounds = array<i64: 1, 64, 32>}, {pipeline_mode = #tpu.pipeline_mode<synchronous>, transform_indices = @transform_8, window_bounds = array<i64: 32, 128>}, {pipeline_mode = #tpu.pipeline_mode<synchronous>, transform_indices = @transform_9, window_bounds = array<i64: 1, 128>}, {transform_indices = @transform_10, window_bounds = array<i64: 1, 16, 128>}]} {
    %c0_i32 = arith.constant 0 : i32
    %0 = arith.cmpi eq, %arg1, %c0_i32 : i32
    %1 = arith.extui %0 : i1 to i32
    %c0_i32_0 = arith.constant 0 : i32
    %2 = arith.cmpi ne, %1, %c0_i32_0 : i32
    scf.if %2 {
      %c0_67 = arith.constant 0 : index
      %c0_68 = arith.constant 0 : index
      %c0_69 = arith.constant 0 : index
      %181 = vector.load %arg2[%c0_67, %c0_68, %c0_69] : memref<1x16x32xf32, #tpu.memory_space<vmem>>, vector<1x16x32xf32>
      %182 = vector.shape_cast %181 : vector<1x16x32xf32> to vector<16x32xf32>
      %c0_70 = arith.constant 0 : index
      %c0_71 = arith.constant 0 : index
      %183 = vector.load %arg13[%c0_70, %c0_71] : memref<16x32xf32, #tpu.memory_space<vmem>>, vector<16x32xf32>
      tpu.vector_store %arg13[%c0_70, %c0_71], %182 {strides = array<i32>} : memref<16x32xf32, #tpu.memory_space<vmem>>, vector<16x32xf32>,
    } else {
    }
    %c0 = arith.constant 0 : index
    %c0_1 = arith.constant 0 : index
    %3 = vector.load %arg13[%c0, %c0_1] : memref<16x32xf32, #tpu.memory_space<vmem>>, vector<16x32xf32>
    %c0_2 = arith.constant 0 : index
    %c0_3 = arith.constant 0 : index
    %c0_4 = arith.constant 0 : index
    %4 = vector.load %arg6[%c0_2, %c0_3, %c0_4] : memref<1x6x32xf32, #tpu.memory_space<vmem>>, vector<1x6x32xf32>
    %5 = vector.shape_cast %4 : vector<1x6x32xf32> to vector<6x32xf32>
    %6 = vector.extract_strided_slice %5 {offsets = [0, 0], sizes = [1, 32], strides = [1, 1]} : vector<6x32xf32> to vector<1x32xf32>
    %7 = vector.extract_strided_slice %5 {offsets = [1, 0], sizes = [1, 32], strides = [1, 1]} : vector<6x32xf32> to vector<1x32xf32>
    %8 = vector.extract_strided_slice %5 {offsets = [2, 0], sizes = [1, 32], strides = [1, 1]} : vector<6x32xf32> to vector<1x32xf32>
    %9 = vector.extract_strided_slice %5 {offsets = [3, 0], sizes = [1, 32], strides = [1, 1]} : vector<6x32xf32> to vector<1x32xf32>
    %10 = vector.extract_strided_slice %5 {offsets = [4, 0], sizes = [1, 32], strides = [1, 1]} : vector<6x32xf32> to vector<1x32xf32>
    %11 = vector.extract_strided_slice %5 {offsets = [5, 0], sizes = [1, 32], strides = [1, 1]} : vector<6x32xf32> to vector<1x32xf32>
    %cst = arith.constant dense<0.000000e+00> : vector<16xf32>
    %12 = vector.multi_reduction <add>, %3, %cst [1] : vector<16x32xf32> to vector<16xf32>
    %13 = vector.shape_cast %12 : vector<16xf32> to vector<16x1xf32>
    %cst_5 = arith.constant 3.200000e+01 : f32
    %14 = vector.broadcast %cst_5 : f32 to vector<16x1xf32>
    %15 = arith.divf %13, %14 : vector<16x1xf32>
    %16 = vector.broadcast %15 : vector<16x1xf32> to vector<16x32xf32>
    %17 = arith.subf %3, %16 : vector<16x32xf32>
    %18 = arith.mulf %17, %17 : vector<16x32xf32>
    %cst_6 = arith.constant dense<0.000000e+00> : vector<16xf32>
    %19 = vector.multi_reduction <add>, %18, %cst_6 [1] : vector<16x32xf32> to vector<16xf32>
    %20 = vector.shape_cast %19 : vector<16xf32> to vector<16x1xf32>
    %cst_7 = arith.constant 3.200000e+01 : f32
    %21 = vector.broadcast %cst_7 : f32 to vector<16x1xf32>
    %22 = arith.divf %20, %21 : vector<16x1xf32>
    %23 = vector.broadcast %15 : vector<16x1xf32> to vector<16x32xf32>
    %24 = arith.subf %3, %23 : vector<16x32xf32>
    %cst_8 = arith.constant 9.99999974E-6 : f32
    %25 = vector.broadcast %cst_8 : f32 to vector<16x1xf32>
    %26 = arith.addf %22, %25 : vector<16x1xf32>
    %27 = math.rsqrt %26 : vector<16x1xf32>
    %28 = vector.broadcast %27 : vector<16x1xf32> to vector<16x32xf32>
    %29 = arith.mulf %24, %28 : vector<16x32xf32>
    %30 = vector.broadcast %6 : vector<1x32xf32> to vector<16x32xf32>
    %31 = arith.mulf %29, %30 : vector<16x32xf32>
    %32 = vector.broadcast %7 : vector<1x32xf32> to vector<16x32xf32>
    %33 = arith.addf %31, %32 : vector<16x32xf32>
    %34 = arith.truncf %33 : vector<16x32xf32> to vector<16x32xbf16>
    %c0_9 = arith.constant 0 : index
    %c0_10 = arith.constant 0 : index
    %c0_11 = arith.constant 0 : index
    %35 = vector.load %arg3[%c0_9, %c0_10, %c0_11] : memref<1x32x96xbf16, #tpu.memory_space<vmem>>, vector<1x32x96xbf16>
    %36 = vector.shape_cast %35 : vector<1x32x96xbf16> to vector<32x96xbf16>
    %cst_12 = arith.constant dense<0.000000e+00> : vector<16x96xf32>
    %37 = tpu.matmul %34, %36, %cst_12 {dimension_numbers = #tpu.dot_dimension_numbers<[1], [0], [0], [1], [0, 0, 1, 1], [], []>} : vector<16x32xbf16>, vector<32x96xbf16>, vector<16x96xf32> -> vector<16x96xf32>
    %c0_13 = arith.constant 0 : index
    %c0_14 = arith.constant 0 : index
    %c0_15 = arith.constant 0 : index
    %38 = vector.load %arg4[%c0_13, %c0_14, %c0_15] : memref<1x1x96xf32, #tpu.memory_space<vmem>>, vector<1x1x96xf32>
    %39 = vector.shape_cast %38 : vector<1x1x96xf32> to vector<1x96xf32>
    %40 = vector.broadcast %39 : vector<1x96xf32> to vector<16x96xf32>
    %41 = arith.addf %37, %40 : vector<16x96xf32>
    %42 = vector.extract_strided_slice %41 {offsets = [0, 0], sizes = [16, 8], strides = [1, 1]} : vector<16x96xf32> to vector<16x8xf32>
    %43 = arith.truncf %42 : vector<16x8xf32> to vector<16x8xbf16>
    %44 = vector.extract_strided_slice %41 {offsets = [0, 32], sizes = [16, 8], strides = [1, 1]} : vector<16x96xf32> to vector<16x8xf32>
    %45 = arith.truncf %44 : vector<16x8xf32> to vector<16x8xbf16>
    %46 = vector.extract_strided_slice %41 {offsets = [0, 64], sizes = [16, 8], strides = [1, 1]} : vector<16x96xf32> to vector<16x8xf32>
    %47 = arith.truncf %46 : vector<16x8xf32> to vector<16x8xbf16>
    %cst_16 = arith.constant dense<0.000000e+00> : vector<16x16xf32>
    %48 = tpu.matmul %43, %45, %cst_16 {dimension_numbers = #tpu.dot_dimension_numbers<[1], [1], [0], [0], [0, 0, 1, 0], [], []>} : vector<16x8xbf16>, vector<16x8xbf16>, vector<16x16xf32> -> vector<16x16xf32>
    %cst_17 = arith.constant 0.353553385 : f32
    %49 = vector.broadcast %cst_17 : f32 to vector<16x16xf32>
    %50 = arith.mulf %48, %49 : vector<16x16xf32>
    %cst_18 = arith.constant dense<0xFF800000> : vector<16xf32>
    %51 = vector.multi_reduction <maximumf>, %50, %cst_18 [1] : vector<16x16xf32> to vector<16xf32>
    %52 = vector.shape_cast %51 : vector<16xf32> to vector<16x1xf32>
    %53 = vector.broadcast %52 : vector<16x1xf32> to vector<16x16xf32>
    %54 = arith.subf %50, %53 : vector<16x16xf32>
    %55 = math.exp %54 : vector<16x16xf32>
    %cst_19 = arith.constant dense<0.000000e+00> : vector<16xf32>
    %56 = vector.multi_reduction <add>, %55, %cst_19 [1] : vector<16x16xf32> to vector<16xf32>
    %57 = vector.shape_cast %56 : vector<16xf32> to vector<16x1xf32>
    %58 = tpu.reciprocal %57 {approx = true} : vector<16x1xf32> -> vector<16x1xf32>
    %59 = vector.broadcast %58 : vector<16x1xf32> to vector<16x16xf32>
    %60 = arith.mulf %55, %59 : vector<16x16xf32>
    %61 = arith.truncf %60 : vector<16x16xf32> to vector<16x16xbf16>
    %cst_20 = arith.constant dense<0.000000e+00> : vector<16x8xf32>
    %62 = tpu.matmul %61, %47, %cst_20 {dimension_numbers = #tpu.dot_dimension_numbers<[1], [0], [0], [1], [0, 0, 1, 1], [], []>} : vector<16x16xbf16>, vector<16x8xbf16>, vector<16x8xf32> -> vector<16x8xf32>
    %c0_21 = arith.constant 0 : index
    %c0_22 = arith.constant 0 : index
    %63 = vector.load %arg14[%c0_21, %c0_22] : memref<16x32xf32, #tpu.memory_space<vmem>>, vector<16x8xf32>
    tpu.vector_store %arg14[%c0_21, %c0_22], %62 {strides = array<i32>} : memref<16x32xf32, #tpu.memory_space<vmem>>, vector<16x8xf32>,
    %64 = vector.extract_strided_slice %41 {offsets = [0, 8], sizes = [16, 8], strides = [1, 1]} : vector<16x96xf32> to vector<16x8xf32>
    %65 = arith.truncf %64 : vector<16x8xf32> to vector<16x8xbf16>
    %66 = vector.extract_strided_slice %41 {offsets = [0, 40], sizes = [16, 8], strides = [1, 1]} : vector<16x96xf32> to vector<16x8xf32>
    %67 = arith.truncf %66 : vector<16x8xf32> to vector<16x8xbf16>
    %68 = vector.extract_strided_slice %41 {offsets = [0, 72], sizes = [16, 8], strides = [1, 1]} : vector<16x96xf32> to vector<16x8xf32>
    %69 = arith.truncf %68 : vector<16x8xf32> to vector<16x8xbf16>
    %cst_23 = arith.constant dense<0.000000e+00> : vector<16x16xf32>
    %70 = tpu.matmul %65, %67, %cst_23 {dimension_numbers = #tpu.dot_dimension_numbers<[1], [1], [0], [0], [0, 0, 1, 0], [], []>} : vector<16x8xbf16>, vector<16x8xbf16>, vector<16x16xf32> -> vector<16x16xf32>
    %cst_24 = arith.constant 0.353553385 : f32
    %71 = vector.broadcast %cst_24 : f32 to vector<16x16xf32>
    %72 = arith.mulf %70, %71 : vector<16x16xf32>
    %cst_25 = arith.constant dense<0xFF800000> : vector<16xf32>
    %73 = vector.multi_reduction <maximumf>, %72, %cst_25 [1] : vector<16x16xf32> to vector<16xf32>
    %74 = vector.shape_cast %73 : vector<16xf32> to vector<16x1xf32>
    %75 = vector.broadcast %74 : vector<16x1xf32> to vector<16x16xf32>
    %76 = arith.subf %72, %75 : vector<16x16xf32>
    %77 = math.exp %76 : vector<16x16xf32>
    %cst_26 = arith.constant dense<0.000000e+00> : vector<16xf32>
    %78 = vector.multi_reduction <add>, %77, %cst_26 [1] : vector<16x16xf32> to vector<16xf32>
    %79 = vector.shape_cast %78 : vector<16xf32> to vector<16x1xf32>
    %80 = tpu.reciprocal %79 {approx = true} : vector<16x1xf32> -> vector<16x1xf32>
    %81 = vector.broadcast %80 : vector<16x1xf32> to vector<16x16xf32>
    %82 = arith.mulf %77, %81 : vector<16x16xf32>
    %83 = arith.truncf %82 : vector<16x16xf32> to vector<16x16xbf16>
    %cst_27 = arith.constant dense<0.000000e+00> : vector<16x8xf32>
    %84 = tpu.matmul %83, %69, %cst_27 {dimension_numbers = #tpu.dot_dimension_numbers<[1], [0], [0], [1], [0, 0, 1, 1], [], []>} : vector<16x16xbf16>, vector<16x8xbf16>, vector<16x8xf32> -> vector<16x8xf32>
    %c0_28 = arith.constant 0 : index
    %c8 = arith.constant 8 : index
    %85 = vector.load %arg14[%c0_28, %c8] : memref<16x32xf32, #tpu.memory_space<vmem>>, vector<16x8xf32>
    tpu.vector_store %arg14[%c0_28, %c8], %84 {strides = array<i32>} : memref<16x32xf32, #tpu.memory_space<vmem>>, vector<16x8xf32>,
    %86 = vector.extract_strided_slice %41 {offsets = [0, 16], sizes = [16, 8], strides = [1, 1]} : vector<16x96xf32> to vector<16x8xf32>
    %87 = arith.truncf %86 : vector<16x8xf32> to vector<16x8xbf16>
    %88 = vector.extract_strided_slice %41 {offsets = [0, 48], sizes = [16, 8], strides = [1, 1]} : vector<16x96xf32> to vector<16x8xf32>
    %89 = arith.truncf %88 : vector<16x8xf32> to vector<16x8xbf16>
    %90 = vector.extract_strided_slice %41 {offsets = [0, 80], sizes = [16, 8], strides = [1, 1]} : vector<16x96xf32> to vector<16x8xf32>
    %91 = arith.truncf %90 : vector<16x8xf32> to vector<16x8xbf16>
    %cst_29 = arith.constant dense<0.000000e+00> : vector<16x16xf32>
    %92 = tpu.matmul %87, %89, %cst_29 {dimension_numbers = #tpu.dot_dimension_numbers<[1], [1], [0], [0], [0, 0, 1, 0], [], []>} : vector<16x8xbf16>, vector<16x8xbf16>, vector<16x16xf32> -> vector<16x16xf32>
    %cst_30 = arith.constant 0.353553385 : f32
    %93 = vector.broadcast %cst_30 : f32 to vector<16x16xf32>
    %94 = arith.mulf %92, %93 : vector<16x16xf32>
    %cst_31 = arith.constant dense<0xFF800000> : vector<16xf32>
    %95 = vector.multi_reduction <maximumf>, %94, %cst_31 [1] : vector<16x16xf32> to vector<16xf32>
    %96 = vector.shape_cast %95 : vector<16xf32> to vector<16x1xf32>
    %97 = vector.broadcast %96 : vector<16x1xf32> to vector<16x16xf32>
    %98 = arith.subf %94, %97 : vector<16x16xf32>
    %99 = math.exp %98 : vector<16x16xf32>
    %cst_32 = arith.constant dense<0.000000e+00> : vector<16xf32>
    %100 = vector.multi_reduction <add>, %99, %cst_32 [1] : vector<16x16xf32> to vector<16xf32>
    %101 = vector.shape_cast %100 : vector<16xf32> to vector<16x1xf32>
    %102 = tpu.reciprocal %101 {approx = true} : vector<16x1xf32> -> vector<16x1xf32>
    %103 = vector.broadcast %102 : vector<16x1xf32> to vector<16x16xf32>
    %104 = arith.mulf %99, %103 : vector<16x16xf32>
    %105 = arith.truncf %104 : vector<16x16xf32> to vector<16x16xbf16>
    %cst_33 = arith.constant dense<0.000000e+00> : vector<16x8xf32>
    %106 = tpu.matmul %105, %91, %cst_33 {dimension_numbers = #tpu.dot_dimension_numbers<[1], [0], [0], [1], [0, 0, 1, 1], [], []>} : vector<16x16xbf16>, vector<16x8xbf16>, vector<16x8xf32> -> vector<16x8xf32>
    %c0_34 = arith.constant 0 : index
    %c16 = arith.constant 16 : index
    %107 = vector.load %arg14[%c0_34, %c16] : memref<16x32xf32, #tpu.memory_space<vmem>>, vector<16x8xf32>
    tpu.vector_store %arg14[%c0_34, %c16], %106 {strides = array<i32>} : memref<16x32xf32, #tpu.memory_space<vmem>>, vector<16x8xf32>,
    %108 = vector.extract_strided_slice %41 {offsets = [0, 24], sizes = [16, 8], strides = [1, 1]} : vector<16x96xf32> to vector<16x8xf32>
    %109 = arith.truncf %108 : vector<16x8xf32> to vector<16x8xbf16>
    %110 = vector.extract_strided_slice %41 {offsets = [0, 56], sizes = [16, 8], strides = [1, 1]} : vector<16x96xf32> to vector<16x8xf32>
    %111 = arith.truncf %110 : vector<16x8xf32> to vector<16x8xbf16>
    %112 = vector.extract_strided_slice %41 {offsets = [0, 88], sizes = [16, 8], strides = [1, 1]} : vector<16x96xf32> to vector<16x8xf32>
    %113 = arith.truncf %112 : vector<16x8xf32> to vector<16x8xbf16>
    %cst_35 = arith.constant dense<0.000000e+00> : vector<16x16xf32>
    %114 = tpu.matmul %109, %111, %cst_35 {dimension_numbers = #tpu.dot_dimension_numbers<[1], [1], [0], [0], [0, 0, 1, 0], [], []>} : vector<16x8xbf16>, vector<16x8xbf16>, vector<16x16xf32> -> vector<16x16xf32>
    %cst_36 = arith.constant 0.353553385 : f32
    %115 = vector.broadcast %cst_36 : f32 to vector<16x16xf32>
    %116 = arith.mulf %114, %115 : vector<16x16xf32>
    %cst_37 = arith.constant dense<0xFF800000> : vector<16xf32>
    %117 = vector.multi_reduction <maximumf>, %116, %cst_37 [1] : vector<16x16xf32> to vector<16xf32>
    %118 = vector.shape_cast %117 : vector<16xf32> to vector<16x1xf32>
    %119 = vector.broadcast %118 : vector<16x1xf32> to vector<16x16xf32>
    %120 = arith.subf %116, %119 : vector<16x16xf32>
    %121 = math.exp %120 : vector<16x16xf32>
    %cst_38 = arith.constant dense<0.000000e+00> : vector<16xf32>
    %122 = vector.multi_reduction <add>, %121, %cst_38 [1] : vector<16x16xf32> to vector<16xf32>
    %123 = vector.shape_cast %122 : vector<16xf32> to vector<16x1xf32>
    %124 = tpu.reciprocal %123 {approx = true} : vector<16x1xf32> -> vector<16x1xf32>
    %125 = vector.broadcast %124 : vector<16x1xf32> to vector<16x16xf32>
    %126 = arith.mulf %121, %125 : vector<16x16xf32>
    %127 = arith.truncf %126 : vector<16x16xf32> to vector<16x16xbf16>
    %cst_39 = arith.constant dense<0.000000e+00> : vector<16x8xf32>
    %128 = tpu.matmul %127, %113, %cst_39 {dimension_numbers = #tpu.dot_dimension_numbers<[1], [0], [0], [1], [0, 0, 1, 1], [], []>} : vector<16x16xbf16>, vector<16x8xbf16>, vector<16x8xf32> -> vector<16x8xf32>
    %c0_40 = arith.constant 0 : index
    %c24 = arith.constant 24 : index
    %129 = vector.load %arg14[%c0_40, %c24] : memref<16x32xf32, #tpu.memory_space<vmem>>, vector<16x8xf32>
    tpu.vector_store %arg14[%c0_40, %c24], %128 {strides = array<i32>} : memref<16x32xf32, #tpu.memory_space<vmem>>, vector<16x8xf32>,
    %c0_41 = arith.constant 0 : index
    %c0_42 = arith.constant 0 : index
    %130 = vector.load %arg14[%c0_41, %c0_42] : memref<16x32xf32, #tpu.memory_space<vmem>>, vector<16x32xf32>
    %131 = arith.truncf %130 : vector<16x32xf32> to vector<16x32xbf16>
    %c0_43 = arith.constant 0 : index
    %c0_44 = arith.constant 0 : index
    %c0_45 = arith.constant 0 : index
    %132 = vector.load %arg5[%c0_43, %c0_44, %c0_45] : memref<1x32x32xbf16, #tpu.memory_space<vmem>>, vector<1x32x32xbf16>
    %133 = vector.shape_cast %132 : vector<1x32x32xbf16> to vector<32x32xbf16>
    %cst_46 = arith.constant dense<0.000000e+00> : vector<16x32xf32>
    %134 = tpu.matmul %131, %133, %cst_46 {dimension_numbers = #tpu.dot_dimension_numbers<[1], [0], [0], [1], [0, 0, 1, 1], [], []>} : vector<16x32xbf16>, vector<32x32xbf16>, vector<16x32xf32> -> vector<16x32xf32>
    %135 = arith.addf %3, %134 : vector<16x32xf32>
    %136 = vector.broadcast %10 : vector<1x32xf32> to vector<16x32xf32>
    %137 = arith.addf %135, %136 : vector<16x32xf32>
    %cst_47 = arith.constant dense<0.000000e+00> : vector<16xf32>
    %138 = vector.multi_reduction <add>, %137, %cst_47 [1] : vector<16x32xf32> to vector<16xf32>
    %139 = vector.shape_cast %138 : vector<16xf32> to vector<16x1xf32>
    %cst_48 = arith.constant 3.200000e+01 : f32
    %140 = vector.broadcast %cst_48 : f32 to vector<16x1xf32>
    %141 = arith.divf %139, %140 : vector<16x1xf32>
    %142 = vector.broadcast %141 : vector<16x1xf32> to vector<16x32xf32>
    %143 = arith.subf %137, %142 : vector<16x32xf32>
    %144 = arith.mulf %143, %143 : vector<16x32xf32>
    %cst_49 = arith.constant dense<0.000000e+00> : vector<16xf32>
    %145 = vector.multi_reduction <add>, %144, %cst_49 [1] : vector<16x32xf32> to vector<16xf32>
    %146 = vector.shape_cast %145 : vector<16xf32> to vector<16x1xf32>
    %cst_50 = arith.constant 3.200000e+01 : f32
    %147 = vector.broadcast %cst_50 : f32 to vector<16x1xf32>
    %148 = arith.divf %146, %147 : vector<16x1xf32>
    %149 = vector.broadcast %141 : vector<16x1xf32> to vector<16x32xf32>
    %150 = arith.subf %137, %149 : vector<16x32xf32>
    %cst_51 = arith.constant 9.99999974E-6 : f32
    %151 = vector.broadcast %cst_51 : f32 to vector<16x1xf32>
    %152 = arith.addf %148, %151 : vector<16x1xf32>
    %153 = math.rsqrt %152 : vector<16x1xf32>
    %154 = vector.broadcast %153 : vector<16x1xf32> to vector<16x32xf32>
    %155 = arith.mulf %150, %154 : vector<16x32xf32>
    %156 = vector.broadcast %8 : vector<1x32xf32> to vector<16x32xf32>
    %157 = arith.mulf %155, %156 : vector<16x32xf32>
    %158 = vector.broadcast %9 : vector<1x32xf32> to vector<16x32xf32>
    %159 = arith.addf %157, %158 : vector<16x32xf32>
    %160 = arith.truncf %159 : vector<16x32xf32> to vector<16x32xbf16>
    %c0_52 = arith.constant 0 : index
    %c0_53 = arith.constant 0 : index
    %c0_54 = arith.constant 0 : index
    %161 = vector.load %arg7[%c0_52, %c0_53, %c0_54] : memref<1x32x64xbf16, #tpu.memory_space<vmem>>, vector<1x32x64xbf16>
    %162 = vector.shape_cast %161 : vector<1x32x64xbf16> to vector<32x64xbf16>
    %cst_55 = arith.constant dense<0.000000e+00> : vector<16x64xf32>
    %163 = tpu.matmul %160, %162, %cst_55 {dimension_numbers = #tpu.dot_dimension_numbers<[1], [0], [0], [1], [0, 0, 1, 1], [], []>} : vector<16x32xbf16>, vector<32x64xbf16>, vector<16x64xf32> -> vector<16x64xf32>
    %c0_56 = arith.constant 0 : index
    %c0_57 = arith.constant 0 : index
    %c0_58 = arith.constant 0 : index
    %164 = vector.load %arg8[%c0_56, %c0_57, %c0_58] : memref<1x1x64xf32, #tpu.memory_space<vmem>>, vector<1x1x64xf32>
    %165 = vector.shape_cast %164 : vector<1x1x64xf32> to vector<1x64xf32>
    %166 = vector.broadcast %165 : vector<1x64xf32> to vector<16x64xf32>
    %167 = arith.addf %163, %166 : vector<16x64xf32>
    %cst_59 = arith.constant 0.000000e+00 : f32
    %168 = vector.broadcast %cst_59 : f32 to vector<16x64xf32>
    %169 = arith.maximumf %167, %168 : vector<16x64xf32>
    %170 = arith.truncf %169 : vector<16x64xf32> to vector<16x64xbf16>
    %c0_60 = arith.constant 0 : index
    %c0_61 = arith.constant 0 : index
    %c0_62 = arith.constant 0 : index
    %171 = vector.load %arg9[%c0_60, %c0_61, %c0_62] : memref<1x64x32xbf16, #tpu.memory_space<vmem>>, vector<1x64x32xbf16>
    %172 = vector.shape_cast %171 : vector<1x64x32xbf16> to vector<64x32xbf16>
    %cst_63 = arith.constant dense<0.000000e+00> : vector<16x32xf32>
    %173 = tpu.matmul %170, %172, %cst_63 {dimension_numbers = #tpu.dot_dimension_numbers<[1], [0], [0], [1], [0, 0, 1, 1], [], []>} : vector<16x64xbf16>, vector<64x32xbf16>, vector<16x32xf32> -> vector<16x32xf32>
    %174 = vector.broadcast %11 : vector<1x32xf32> to vector<16x32xf32>
    %175 = arith.addf %173, %174 : vector<16x32xf32>
    %176 = arith.addf %137, %175 : vector<16x32xf32>
    %c0_64 = arith.constant 0 : index
    %c0_65 = arith.constant 0 : index
    %177 = vector.load %arg13[%c0_64, %c0_65] : memref<16x32xf32, #tpu.memory_space<vmem>>, vector<16x32xf32>
    tpu.vector_store %arg13[%c0_64, %c0_65], %176 {strides = array<i32>} : memref<16x32xf32, #tpu.memory_space<vmem>>, vector<16x32xf32>,
    %c1_i32 = arith.constant 1 : i32
    %178 = arith.cmpi eq, %arg1, %c1_i32 : i32
    %179 = arith.extui %178 : i1 to i32
    %c0_i32_66 = arith.constant 0 : i32
    %180 = arith.cmpi ne, %179, %c0_i32_66 : i32
    scf.if %180 {
      %c0_67 = arith.constant 0 : index
      %c0_68 = arith.constant 0 : index
      %181 = vector.load %arg13[%c0_67, %c0_68] : memref<16x32xf32, #tpu.memory_space<vmem>>, vector<16x32xf32>
      %182 = arith.truncf %181 : vector<16x32xf32> to vector<16x32xbf16>
      %c0_69 = arith.constant 0 : index
      %c0_70 = arith.constant 0 : index
      %183 = vector.load %arg10[%c0_69, %c0_70] : memref<32x128xbf16, #tpu.memory_space<vmem>>, vector<32x128xbf16>
      %cst_71 = arith.constant dense<0.000000e+00> : vector<16x128xf32>
      %184 = tpu.matmul %182, %183, %cst_71 {dimension_numbers = #tpu.dot_dimension_numbers<[1], [0], [0], [1], [0, 0, 1, 1], [], []>} : vector<16x32xbf16>, vector<32x128xbf16>, vector<16x128xf32> -> vector<16x128xf32>
      %c0_72 = arith.constant 0 : index
      %c0_73 = arith.constant 0 : index
      %185 = vector.load %arg11[%c0_72, %c0_73] : memref<1x128xf32, #tpu.memory_space<vmem>>, vector<1x128xf32>
      %186 = vector.broadcast %185 : vector<1x128xf32> to vector<16x128xf32>
      %187 = arith.addf %184, %186 : vector<16x128xf32>
      %c0_74 = arith.constant 0 : index
      %c0_75 = arith.constant 0 : index
      %c0_76 = arith.constant 0 : index
      %188 = vector.load %arg12[%c0_74, %c0_75, %c0_76] : memref<1x16x128xf32, #tpu.memory_space<vmem>>, vector<1x16x128xf32>
      %189 = vector.shape_cast %188 : vector<1x16x128xf32> to vector<16x128xf32>
      %190 = vector.shape_cast %187 : vector<16x128xf32> to vector<1x16x128xf32>
      tpu.vector_store %arg12[%c0_74, %c0_75, %c0_76], %190 {strides = array<i32>} : memref<1x16x128xf32, #tpu.memory_space<vmem>>, vector<1x16x128xf32>,
    } else {
    }
    return
  }
  func.func @transform_0(%arg0: i32, %arg1: i32) -> (i32, i32, i32) {
    %c0_i32 = arith.constant 0 : i32
    %c0_i32_0 = arith.constant 0 : i32
    %c0_i32_1 = arith.constant 0 : i32
    return %arg0, %c0_i32, %c0_i32_0 : i32, i32, i32
  }
  func.func @transform_1(%arg0: i32, %arg1: i32) -> (i32, i32, i32) {
    %c0_i32 = arith.constant 0 : i32
    %c0_i32_0 = arith.constant 0 : i32
    %c0_i32_1 = arith.constant 0 : i32
    return %arg1, %c0_i32, %c0_i32_0 : i32, i32, i32
  }
  func.func @transform_2(%arg0: i32, %arg1: i32) -> (i32, i32, i32) {
    %c0_i32 = arith.constant 0 : i32
    %c0_i32_0 = arith.constant 0 : i32
    %c0_i32_1 = arith.constant 0 : i32
    return %arg1, %c0_i32, %c0_i32_0 : i32, i32, i32
  }
  func.func @transform_3(%arg0: i32, %arg1: i32) -> (i32, i32, i32) {
    %c0_i32 = arith.constant 0 : i32
    %c0_i32_0 = arith.constant 0 : i32
    %c0_i32_1 = arith.constant 0 : i32
    return %arg1, %c0_i32, %c0_i32_0 : i32, i32, i32
  }
  func.func @transform_4(%arg0: i32, %arg1: i32) -> (i32, i32, i32) {
    %c0_i32 = arith.constant 0 : i32
    %c0_i32_0 = arith.constant 0 : i32
    %c0_i32_1 = arith.constant 0 : i32
    return %arg1, %c0_i32, %c0_i32_0 : i32, i32, i32
  }
  func.func @transform_5(%arg0: i32, %arg1: i32) -> (i32, i32, i32) {
    %c0_i32 = arith.constant 0 : i32
    %c0_i32_0 = arith.constant 0 : i32
    %c0_i32_1 = arith.constant 0 : i32
    return %arg1, %c0_i32, %c0_i32_0 : i32, i32, i32
  }
  func.func @transform_6(%arg0: i32, %arg1: i32) -> (i32, i32, i32) {
    %c0_i32 = arith.constant 0 : i32
    %c0_i32_0 = arith.constant 0 : i32
    %c0_i32_1 = arith.constant 0 : i32
    return %arg1, %c0_i32, %c0_i32_0 : i32, i32, i32
  }
  func.func @transform_7(%arg0: i32, %arg1: i32) -> (i32, i32, i32) {
    %c0_i32 = arith.constant 0 : i32
    %c0_i32_0 = arith.constant 0 : i32
    %c0_i32_1 = arith.constant 0 : i32
    return %arg1, %c0_i32, %c0_i32_0 : i32, i32, i32
  }
  func.func @transform_8(%arg0: i32, %arg1: i32) -> (i32, i32) {
    %c0_i32 = arith.constant 0 : i32
    %c0_i32_0 = arith.constant 0 : i32
    %c0_i32_1 = arith.constant 0 : i32
    return %c0_i32, %c0_i32_0 : i32, i32
  }
  func.func @transform_9(%arg0: i32, %arg1: i32) -> (i32, i32) {
    %c0_i32 = arith.constant 0 : i32
    %c0_i32_0 = arith.constant 0 : i32
    %c0_i32_1 = arith.constant 0 : i32
    return %c0_i32, %c0_i32_0 : i32, i32
  }
  func.func @transform_10(%arg0: i32, %arg1: i32) -> (i32, i32, i32) {
    %c0_i32 = arith.constant 0 : i32
    %c0_i32_0 = arith.constant 0 : i32
    %c0_i32_1 = arith.constant 0 : i32
    return %arg0, %c0_i32, %c0_i32_0 : i32, i32, i32
  }
}

</mosaic_0001>

<llo_original>
// kernel: transformer_forward.1
$region0: #{transformer_forward.1}
  #allocation0 [shape = 'u32[]', space=smem, size = 0x4, offset = 0x4, fixed_abs, tag = 'smem constant byte address 0x4 - core index']
  #allocation1 [shape = 'u32[144,128]{1,0:T(1,128)}', space=vmem, size = 0x12000, scoped, tag = 'internal scratch']
  #allocation2 [shape = 'f32[16,32]{1,0:T(8,128)}', space=vmem, size = 0x2000, scoped, tag = 'scratch operand']
  #allocation3 [shape = 'f32[16,32]{1,0:T(8,128)}', space=vmem, size = 0x2000, scoped, tag = 'scratch operand']
  %s0 = inlined_call_operand.vmem [shape: f32[2,16,32], index: 0, kind: input, shape index: {}]
  %s1 = inlined_call_operand.vmem [shape: bf16[2,32,96], index: 1, kind: input, shape index: {}]
  %s2 = inlined_call_operand.vmem [shape: f32[2,1,96], index: 2, kind: input, shape index: {}]
  %s3 = inlined_call_operand.vmem [shape: bf16[2,32,32], index: 3, kind: input, shape index: {}]
  %s4 = inlined_call_operand.vmem [shape: f32[2,6,32], index: 4, kind: input, shape index: {}]
  %s5 = inlined_call_operand.vmem [shape: bf16[2,32,64], index: 5, kind: input, shape index: {}]
  %s6 = inlined_call_operand.vmem [shape: f32[2,1,64], index: 6, kind: input, shape index: {}]
  %s7 = inlined_call_operand.vmem [shape: bf16[2,64,32], index: 7, kind: input, shape index: {}]
  %s8 = inlined_call_operand.vmem [shape: bf16[32,128], index: 8, kind: input, shape index: {}]
  %s9 = inlined_call_operand.vmem [shape: f32[1,128], index: 9, kind: input, shape index: {}]
  %s10 = inlined_call_operand.vmem [shape: f32[2,16,128], index: 10, kind: output, shape index: {}]
  %s11 = sld [smem:[#allocation0]]
  $region81: #{transformer_forward.1} parent=0
    _
  %s13 = ssub.s32 1, %s11
  %s14 = scalar_select 0, %s13, %s11
  loop: start=0, step=1, limit=6
  $region2: #{transformer_forward.1} parent=0 // loop_pre_header
    _
  $region3: #{transformer_forward.1} parent=0 // loop_header
    %s16 = sphi 0, %s20
    %p17 = scmp.ge.s32.totalorder %s16, 6
    %s23 = sphi 0, %s35
    %s24 = sphi 0, %s31
    %s25 = sphi 0, %s23
    %s26 = sphi 0, %s24
    %s27 = sphi 0, %s25
    %s28 = sphi 0, %s26
    %s38 = sphi 0, %s40
    %s41 = sphi 0, %s38
    %s42 = sphi 0, %s41
    %s58 = sphi 0, %s42
    %s64 = sphi 0, %s66
    %s67 = sphi 0, %s64
    %s68 = sphi 0, %s67
    %s84 = sphi 0, %s68
    %s90 = sphi 0, %s92
    %s93 = sphi 0, %s90
    %s94 = sphi 0, %s93
    %s110 = sphi 0, %s94
    %s116 = sphi 0, %s118
    %s119 = sphi 0, %s116
    %s120 = sphi 0, %s119
    %s136 = sphi 0, %s120
    %s142 = sphi 0, %s144
    %s145 = sphi 0, %s142
    %s146 = sphi 0, %s145
    %s162 = sphi 0, %s146
    %s168 = sphi 0, %s170
    %s171 = sphi 0, %s168
    %s172 = sphi 0, %s171
    %s188 = sphi 0, %s172
    %s194 = sphi 0, %s196
    %s197 = sphi 0, %s194
    %s198 = sphi 0, %s197
    %s214 = sphi 0, %s198
    %s220 = sphi 0, %s222
    %s223 = sphi 0, %s220
    %s224 = sphi 0, %s223
    %s240 = sphi 0, %s224
    %s244 = sphi 0, %s244
    %s246 = sphi 0, %s244
    %s247 = sphi 0, %s246
    %s261 = sphi 0, %s247
    %s265 = sphi 0, %s265
    %s267 = sphi 0, %s265
    %s268 = sphi 0, %s267
    %s282 = sphi 0, %s268
    %s288 = sphi 0, %s290
    %s291 = sphi 0, %s288
    %s292 = sphi 0, %s291
    %s308 = sphi 0, %s292
  $region4: #{transformer_forward.1} parent=0 // loop_header_branch
    %19 = sbr.rel (%p17) target = $region8
  $region5: #{transformer_forward.1} parent=0 // loop_body
    %s21 = ssub.s32 %s16, 1
    %s22 = ssub.s32 %s16, 2
    %s29 = sadd.s32 1, %s24
    %p30 = scmp.ge.s32.totalorder %s29, 2
    %s31 = scalar_select %p30, 0, %s29
    %s32 = sadd.s32 1, %s23
    %s33 = scalar_select %p30, %s32, %s23
    %p34 = scmp.ge.s32.totalorder %s33, 2
    %s35 = scalar_select %p34, 0, %s33
    %s36 = ssub.s32 %s23, %s35
    %p37 = scmp.eq.s32.totalorder %s36, 0
    %s39 = sadd.s32 %s38, 1
    %s40 = scalar_select %p37, %s38, %s39
    %p43 = pneg %p37
    %p44 = scmp.eq.s32.totalorder %s16, 3
    %p45 = por %p43, %p44
    %p46 = scmp.ne.s32.totalorder %s38, %s41
    %p47 = scmp.eq.s32.totalorder %s16, 0
    %p48 = por %p46, %p47
    %p49 = scmp.ne.s32.totalorder %s38, %s41
    %p50 = scmp.eq.s32.totalorder %s21, 3
    %p51 = por %p49, %p50
    %p52 = scmp.ne.s32.totalorder %s41, %s42
    %p53 = scmp.eq.s32.totalorder %s21, 0
    %p54 = por %p52, %p53
    %p55 = scmp.ne.s32.totalorder %s41, %s42
    %p56 = scmp.eq.s32.totalorder %s22, 3
    %p57 = por %p55, %p56
    %p59 = scmp.ne.s32.totalorder %s42, %s58
    %p60 = scmp.eq.s32.totalorder %s22, 0
    %p61 = por %p59, %p60
    %s62 = ssub.s32 %s24, %s31
    %p63 = scmp.eq.s32.totalorder %s62, 0
    %s65 = sadd.s32 %s64, 1
    %s66 = scalar_select %p63, %s64, %s65
    %p69 = pneg %p63
    %p70 = scmp.eq.s32.totalorder %s16, 3
    %p71 = por %p69, %p70
    %p72 = scmp.ne.s32.totalorder %s64, %s67
    %p73 = scmp.eq.s32.totalorder %s16, 0
    %p74 = por %p72, %p73
    %p75 = scmp.ne.s32.totalorder %s64, %s67
    %p76 = scmp.eq.s32.totalorder %s21, 3
    %p77 = por %p75, %p76
    %p78 = scmp.ne.s32.totalorder %s67, %s68
    %p79 = scmp.eq.s32.totalorder %s21, 0
    %p80 = por %p78, %p79
    %p81 = scmp.ne.s32.totalorder %s67, %s68
    %p82 = scmp.eq.s32.totalorder %s22, 3
    %p83 = por %p81, %p82
    %p85 = scmp.ne.s32.totalorder %s68, %s84
    %p86 = scmp.eq.s32.totalorder %s22, 0
    %p87 = por %p85, %p86
    %s88 = ssub.s32 %s24, %s31
    %p89 = scmp.eq.s32.totalorder %s88, 0
    %s91 = sadd.s32 %s90, 1
    %s92 = scalar_select %p89, %s90, %s91
    %p95 = pneg %p89
    %p96 = scmp.eq.s32.totalorder %s16, 3
    %p97 = por %p95, %p96
    %p98 = scmp.ne.s32.totalorder %s90, %s93
    %p99 = scmp.eq.s32.totalorder %s16, 0
    %p100 = por %p98, %p99
    %p101 = scmp.ne.s32.totalorder %s90, %s93
    %p102 = scmp.eq.s32.totalorder %s21, 3
    %p103 = por %p101, %p102
    %p104 = scmp.ne.s32.totalorder %s93, %s94
    %p105 = scmp.eq.s32.totalorder %s21, 0
    %p106 = por %p104, %p105
    %p107 = scmp.ne.s32.totalorder %s93, %s94
    %p108 = scmp.eq.s32.totalorder %s22, 3
    %p109 = por %p107, %p108
    %p111 = scmp.ne.s32.totalorder %s94, %s110
    %p112 = scmp.eq.s32.totalorder %s22, 0
    %p113 = por %p111, %p112
    %s114 = ssub.s32 %s24, %s31
    %p115 = scmp.eq.s32.totalorder %s114, 0
    %s117 = sadd.s32 %s116, 1
    %s118 = scalar_select %p115, %s116, %s117
    %p121 = pneg %p115
    %p122 = scmp.eq.s32.totalorder %s16, 3
    %p123 = por %p121, %p122
    %p124 = scmp.ne.s32.totalorder %s116, %s119
    %p125 = scmp.eq.s32.totalorder %s16, 0
    %p126 = por %p124, %p125
    %p127 = scmp.ne.s32.totalorder %s116, %s119
    %p128 = scmp.eq.s32.totalorder %s21, 3
    %p129 = por %p127, %p128
    %p130 = scmp.ne.s32.totalorder %s119, %s120
    %p131 = scmp.eq.s32.totalorder %s21, 0
    %p132 = por %p130, %p131
    %p133 = scmp.ne.s32.totalorder %s119, %s120
    %p134 = scmp.eq.s32.totalorder %s22, 3
    %p135 = por %p133, %p134
    %p137 = scmp.ne.s32.totalorder %s120, %s136
    %p138 = scmp.eq.s32.totalorder %s22, 0
    %p139 = por %p137, %p138
    %s140 = ssub.s32 %s24, %s31
    %p141 = scmp.eq.s32.totalorder %s140, 0
    %s143 = sadd.s32 %s142, 1
    %s144 = scalar_select %p141, %s142, %s143
    %p147 = pneg %p141
    %p148 = scmp.eq.s32.totalorder %s16, 3
    %p149 = por %p147, %p148
    %p150 = scmp.ne.s32.totalorder %s142, %s145
    %p151 = scmp.eq.s32.totalorder %s16, 0
    %p152 = por %p150, %p151
    %p153 = scmp.ne.s32.totalorder %s142, %s145
    %p154 = scmp.eq.s32.totalorder %s21, 3
    %p155 = por %p153, %p154
    %p156 = scmp.ne.s32.totalorder %s145, %s146
    %p157 = scmp.eq.s32.totalorder %s21, 0
    %p158 = por %p156, %p157
    %p159 = scmp.ne.s32.totalorder %s145, %s146
    %p160 = scmp.eq.s32.totalorder %s22, 3
    %p161 = por %p159, %p160
    %p163 = scmp.ne.s32.totalorder %s146, %s162
    %p164 = scmp.eq.s32.totalorder %s22, 0
    %p165 = por %p163, %p164
    %s166 = ssub.s32 %s24, %s31
    %p167 = scmp.eq.s32.totalorder %s166, 0
    %s169 = sadd.s32 %s168, 1
    %s170 = scalar_select %p167, %s168, %s169
    %p173 = pneg %p167
    %p174 = scmp.eq.s32.totalorder %s16, 3
    %p175 = por %p173, %p174
    %p176 = scmp.ne.s32.totalorder %s168, %s171
    %p177 = scmp.eq.s32.totalorder %s16, 0
    %p178 = por %p176, %p177
    %p179 = scmp.ne.s32.totalorder %s168, %s171
    %p180 = scmp.eq.s32.totalorder %s21, 3
    %p181 = por %p179, %p180
    %p182 = scmp.ne.s32.totalorder %s171, %s172
    %p183 = scmp.eq.s32.totalorder %s21, 0
    %p184 = por %p182, %p183
    %p185 = scmp.ne.s32.totalorder %s171, %s172
    %p186 = scmp.eq.s32.totalorder %s22, 3
    %p187 = por %p185, %p186
    %p189 = scmp.ne.s32.totalorder %s172, %s188
    %p190 = scmp.eq.s32.totalorder %s22, 0
    %p191 = por %p189, %p190
    %s192 = ssub.s32 %s24, %s31
    %p193 = scmp.eq.s32.totalorder %s192, 0
    %s195 = sadd.s32 %s194, 1
    %s196 = scalar_select %p193, %s194, %s195
    %p199 = pneg %p193
    %p200 = scmp.eq.s32.totalorder %s16, 3
    %p201 = por %p199, %p200
    %p202 = scmp.ne.s32.totalorder %s194, %s197
    %p203 = scmp.eq.s32.totalorder %s16, 0
    %p204 = por %p202, %p203
    %p205 = scmp.ne.s32.totalorder %s194, %s197
    %p206 = scmp.eq.s32.totalorder %s21, 3
    %p207 = por %p205, %p206
    %p208 = scmp.ne.s32.totalorder %s197, %s198
    %p209 = scmp.eq.s32.totalorder %s21, 0
    %p210 = por %p208, %p209
    %p211 = scmp.ne.s32.totalorder %s197, %s198
    %p212 = scmp.eq.s32.totalorder %s22, 3
    %p213 = por %p211, %p212
    %p215 = scmp.ne.s32.totalorder %s198, %s214
    %p216 = scmp.eq.s32.totalorder %s22, 0
    %p217 = por %p215, %p216
    %s218 = ssub.s32 %s24, %s31
    %p219 = scmp.eq.s32.totalorder %s218, 0
    %s221 = sadd.s32 %s220, 1
    %s222 = scalar_select %p219, %s220, %s221
    %p225 = pneg %p219
    %p226 = scmp.eq.s32.totalorder %s16, 3
    %p227 = por %p225, %p226
    %p228 = scmp.ne.s32.totalorder %s220, %s223
    %p229 = scmp.eq.s32.totalorder %s16, 0
    %p230 = por %p228, %p229
    %p231 = scmp.ne.s32.totalorder %s220, %s223
    %p232 = scmp.eq.s32.totalorder %s21, 3
    %p233 = por %p231, %p232
    %p234 = scmp.ne.s32.totalorder %s223, %s224
    %p235 = scmp.eq.s32.totalorder %s21, 0
    %p236 = por %p234, %p235
    %p237 = scmp.ne.s32.totalorder %s223, %s224
    %p238 = scmp.eq.s32.totalorder %s22, 3
    %p239 = por %p237, %p238
    %p241 = scmp.ne.s32.totalorder %s224, %s240
    %p242 = scmp.eq.s32.totalorder %s22, 0
    %p243 = por %p241, %p242
    %s245 = sadd.s32 %s244, 1
    %p248 = scmp.eq.s32.totalorder %s16, 3
    %p249 = scmp.ne.s32.totalorder %s244, %s246
    %p250 = scmp.eq.s32.totalorder %s16, 0
    %p251 = por %p249, %p250
    %p252 = scmp.ne.s32.totalorder %s244, %s246
    %p253 = scmp.eq.s32.totalorder %s21, 3
    %p254 = por %p252, %p253
    %p255 = scmp.ne.s32.totalorder %s246, %s247
    %p256 = scmp.eq.s32.totalorder %s21, 0
    %p257 = por %p255, %p256
    %p258 = scmp.ne.s32.totalorder %s246, %s247
    %p259 = scmp.eq.s32.totalorder %s22, 3
    %p260 = por %p258, %p259
    %p262 = scmp.ne.s32.totalorder %s247, %s261
    %p263 = scmp.eq.s32.totalorder %s22, 0
    %p264 = por %p262, %p263
    %s266 = sadd.s32 %s265, 1
    %p269 = scmp.eq.s32.totalorder %s16, 3
    %p270 = scmp.ne.s32.totalorder %s265, %s267
    %p271 = scmp.eq.s32.totalorder %s16, 0
    %p272 = por %p270, %p271
    %p273 = scmp.ne.s32.totalorder %s265, %s267
    %p274 = scmp.eq.s32.totalorder %s21, 3
    %p275 = por %p273, %p274
    %p276 = scmp.ne.s32.totalorder %s267, %s268
    %p277 = scmp.eq.s32.totalorder %s21, 0
    %p278 = por %p276, %p277
    %p279 = scmp.ne.s32.totalorder %s267, %s268
    %p280 = scmp.eq.s32.totalorder %s22, 3
    %p281 = por %p279, %p280
    %p283 = scmp.ne.s32.totalorder %s268, %s282
    %p284 = scmp.eq.s32.totalorder %s22, 0
    %p285 = por %p283, %p284
    %s286 = ssub.s32 %s23, %s35
    %p287 = scmp.eq.s32.totalorder %s286, 0
    %s289 = sadd.s32 %s288, 1
    %s290 = scalar_select %p287, %s288, %s289
    %p293 = pneg %p287
    %p294 = scmp.eq.s32.totalorder %s16, 3
    %p295 = por %p293, %p294
    %p296 = scmp.ne.s32.totalorder %s288, %s291
    %p297 = scmp.eq.s32.totalorder %s16, 0
    %p298 = por %p296, %p297
    %p299 = scmp.ne.s32.totalorder %s288, %s291
    %p300 = scmp.eq.s32.totalorder %s21, 3
    %p301 = por %p299, %p300
    %p302 = scmp.ne.s32.totalorder %s291, %s292
    %p303 = scmp.eq.s32.totalorder %s21, 0
    %p304 = por %p302, %p303
    %p305 = scmp.ne.s32.totalorder %s291, %s292
    %p306 = scmp.eq.s32.totalorder %s22, 3
    %p307 = por %p305, %p306
    %p309 = scmp.ne.s32.totalorder %s292, %s308
    %p310 = scmp.eq.s32.totalorder %s22, 0
    %p311 = por %p309, %p310
    %p312 = scmp.le.s32.totalorder 1, %s16
    %p313 = scmp.lt.s32.totalorder %s16, 5
    %p314 = pnand %p312, %p313
    %p315 = pneg %p314
    // Predicated region
    $region9: #{transformer_forward.1} parent=5 // pred_check
      _
    $region10: #{transformer_forward.1} parent=5 // pred_check_branch
      %317 = sbr.rel (%p314) target = $region12
    $region11: #{transformer_forward.1} parent=5 // pred_region
      %s318 = ssub.s32 %s16, 1
      // Predicated region
      $region13: #{transformer_forward.1} parent=11 // pred_check
        %p319 = pneg %p257
      $region14: #{transformer_forward.1} parent=11 // pred_check_branch
        %321 = sbr.rel (%p319) target = $region16
      $region15: #{transformer_forward.1} parent=11 // pred_region
        _
      $region16: #{transformer_forward.1} parent=11 // pred_fallthru
        _
      // Predicated region
      $region17: #{transformer_forward.1} parent=11 // pred_check
        %p322 = pneg %p278
      $region18: #{transformer_forward.1} parent=11 // pred_check_branch
        %324 = sbr.rel (%p322) target = $region20
      $region19: #{transformer_forward.1} parent=11 // pred_region
        _
      $region20: #{transformer_forward.1} parent=11 // pred_fallthru
        _
    $region12: #{transformer_forward.1} parent=5 // pred_fallthru
      _
    %p325 = scmp.lt.s32.totalorder %s16, 4
    // Predicated region
    $region21: #{transformer_forward.1} parent=5 // pred_check
      %p326 = pneg %p325
    $region22: #{transformer_forward.1} parent=5 // pred_check_branch
      %328 = sbr.rel (%p326) target = $region24
    $region23: #{transformer_forward.1} parent=5 // pred_region
      // Predicated region
      $region25: #{transformer_forward.1} parent=23 // pred_check
        %p329 = pneg %p48
      $region26: #{transformer_forward.1} parent=23 // pred_check_branch
        %331 = sbr.rel (%p329) target = $region28
      $region27: #{transformer_forward.1} parent=23 // pred_region
        %p332 = scmp.lt.s32.totalorder %s23, 1
        %s333 = scalar_select %p332, %s23, 1
        %s334 = smul.addr %s333, 2
        %s335 = smul.addr %s334, 8
        %s336 = scalar_lea.vmem %s0, %s335
      $region28: #{transformer_forward.1} parent=23 // pred_fallthru
        _
      // Predicated region
      $region29: #{transformer_forward.1} parent=23 // pred_check
        %p337 = pneg %p74
      $region30: #{transformer_forward.1} parent=23 // pred_check_branch
        %339 = sbr.rel (%p337) target = $region32
      $region31: #{transformer_forward.1} parent=23 // pred_region
        %p340 = scmp.lt.s32.totalorder %s24, 1
        %s341 = scalar_select %p340, %s24, 1
        %s342 = smul.addr %s341, 4
        %s343 = smul.addr %s342, 4
        %s344 = scalar_lea.vmem %s1, %s343
      $region32: #{transformer_forward.1} parent=23 // pred_fallthru
        _
      // Predicated region
      $region33: #{transformer_forward.1} parent=23 // pred_check
        %p345 = pneg %p100
      $region34: #{transformer_forward.1} parent=23 // pred_check_branch
        %347 = sbr.rel (%p345) target = $region36
      $region35: #{transformer_forward.1} parent=23 // pred_region
        %p348 = scmp.lt.s32.totalorder %s24, 1
        %s349 = scalar_select %p348, %s24, 1
        %s350 = scalar_lea.vmem %s2, %s349
      $region36: #{transformer_forward.1} parent=23 // pred_fallthru
        _
      // Predicated region
      $region37: #{transformer_forward.1} parent=23 // pred_check
        %p351 = pneg %p126
      $region38: #{transformer_forward.1} parent=23 // pred_check_branch
        %353 = sbr.rel (%p351) target = $region40
      $region39: #{transformer_forward.1} parent=23 // pred_region
        %p354 = scmp.lt.s32.totalorder %s24, 1
        %s355 = scalar_select %p354, %s24, 1
        %s356 = smul.addr %s355, 4
        %s357 = smul.addr %s356, 4
        %s358 = scalar_lea.vmem %s3, %s357
      $region40: #{transformer_forward.1} parent=23 // pred_fallthru
        _
      // Predicated region
      $region41: #{transformer_forward.1} parent=23 // pred_check
        %p359 = pneg %p152
      $region42: #{transformer_forward.1} parent=23 // pred_check_branch
        %361 = sbr.rel (%p359) target = $region44
      $region43: #{transformer_forward.1} parent=23 // pred_region
        %p362 = scmp.lt.s32.totalorder %s24, 1
        %s363 = scalar_select %p362, %s24, 1
        %s364 = smul.addr %s363, 8
        %s365 = scalar_lea.vmem %s4, %s364
      $region44: #{transformer_forward.1} parent=23 // pred_fallthru
        _
      // Predicated region
      $region45: #{transformer_forward.1} parent=23 // pred_check
        %p366 = pneg %p178
      $region46: #{transformer_forward.1} parent=23 // pred_check_branch
        %368 = sbr.rel (%p366) target = $region48
      $region47: #{transformer_forward.1} parent=23 // pred_region
        %p369 = scmp.lt.s32.totalorder %s24, 1
        %s370 = scalar_select %p369, %s24, 1
        %s371 = smul.addr %s370, 4
        %s372 = smul.addr %s371, 4
        %s373 = scalar_lea.vmem %s5, %s372
      $region48: #{transformer_forward.1} parent=23 // pred_fallthru
        _
      // Predicated region
      $region49: #{transformer_forward.1} parent=23 // pred_check
        %p374 = pneg %p204
      $region50: #{transformer_forward.1} parent=23 // pred_check_branch
        %376 = sbr.rel (%p374) target = $region52
      $region51: #{transformer_forward.1} parent=23 // pred_region
        %p377 = scmp.lt.s32.totalorder %s24, 1
        %s378 = scalar_select %p377, %s24, 1
        %s379 = scalar_lea.vmem %s6, %s378
      $region52: #{transformer_forward.1} parent=23 // pred_fallthru
        _
      // Predicated region
      $region53: #{transformer_forward.1} parent=23 // pred_check
        %p380 = pneg %p230
      $region54: #{transformer_forward.1} parent=23 // pred_check_branch
        %382 = sbr.rel (%p380) target = $region56
      $region55: #{transformer_forward.1} parent=23 // pred_region
        %p383 = scmp.lt.s32.totalorder %s24, 1
        %s384 = scalar_select %p383, %s24, 1
        %s385 = smul.addr %s384, 8
        %s386 = smul.addr %s385, 4
        %s387 = scalar_lea.vmem %s7, %s386
      $region56: #{transformer_forward.1} parent=23 // pred_fallthru
        _
    $region24: #{transformer_forward.1} parent=5 // pred_fallthru
      _
    %p388 = scmp.le.s32.totalorder 1, %s16
    %p389 = scmp.lt.s32.totalorder %s16, 5
    %p390 = pnand %p388, %p389
    %p391 = pneg %p390
    // Predicated region
    $region57: #{transformer_forward.1} parent=5 // pred_check
      _
    $region58: #{transformer_forward.1} parent=5 // pred_check_branch
      %393 = sbr.rel (%p390) target = $region60
    $region59: #{transformer_forward.1} parent=5 // pred_region
      %s394 = ssub.s32 %s16, 1
      %p395 = scmp.lt.s32.totalorder %s25, 1
      %s396 = scalar_select %p395, %s25, 1
      %s397 = smul.addr %s396, 2
      %s398 = smul.addr %s397, 8
      %s399 = scalar_lea.vmem %s0, %s398
      %p400 = pneg %p54
      %p401 = pneg %p51
      %p402 = scmp.lt.s32.totalorder %s26, 1
      %s403 = scalar_select %p402, %s26, 1
      %s404 = smul.addr %s403, 4
      %s405 = smul.addr %s404, 4
      %s406 = scalar_lea.vmem %s1, %s405
      %p407 = pneg %p80
      %p408 = pneg %p77
      %p409 = scmp.lt.s32.totalorder %s26, 1
      %s410 = scalar_select %p409, %s26, 1
      %s411 = scalar_lea.vmem %s2, %s410
      %p412 = pneg %p106
      %p413 = pneg %p103
      %p414 = scmp.lt.s32.totalorder %s26, 1
      %s415 = scalar_select %p414, %s26, 1
      %s416 = smul.addr %s415, 4
      %s417 = smul.addr %s416, 4
      %s418 = scalar_lea.vmem %s3, %s417
      %p419 = pneg %p132
      %p420 = pneg %p129
      %p421 = scmp.lt.s32.totalorder %s26, 1
      %s422 = scalar_select %p421, %s26, 1
      %s423 = smul.addr %s422, 8
      %s424 = scalar_lea.vmem %s4, %s423
      %p425 = pneg %p158
      %p426 = pneg %p155
      %p427 = scmp.lt.s32.totalorder %s26, 1
      %s428 = scalar_select %p427, %s26, 1
      %s429 = smul.addr %s428, 4
      %s430 = smul.addr %s429, 4
      %s431 = scalar_lea.vmem %s5, %s430
      %p432 = pneg %p184
      %p433 = pneg %p181
      %p434 = scmp.lt.s32.totalorder %s26, 1
      %s435 = scalar_select %p434, %s26, 1
      %s436 = scalar_lea.vmem %s6, %s435
      %p437 = pneg %p210
      %p438 = pneg %p207
      %p439 = scmp.lt.s32.totalorder %s26, 1
      %s440 = scalar_select %p439, %s26, 1
      %s441 = smul.addr %s440, 8
      %s442 = smul.addr %s441, 4
      %s443 = scalar_lea.vmem %s7, %s442
      %p444 = pneg %p236
      %p445 = pneg %p233
      %p446 = pneg %p257
      %p447 = pneg %p254
      %p448 = pneg %p278
      %p449 = pneg %p275
      %p450 = pneg %p304
      %p451 = pneg %p301
      %p452 = scmp.lt.s32.totalorder %s25, 1
      %s453 = scalar_select %p452, %s25, 1
      %s454 = smul.addr %s453, 2
      %s455 = smul.addr %s454, 8
      %s456 = scalar_lea.vmem %s10, %s455
      %p457 = scmp.lt.s32.totalorder %s25, 1
      %s458 = scalar_select %p457, %s25, 1
      %s459 = smul.addr %s458, 2
      %s460 = smul.addr %s459, 8
      %s461 = scalar_lea.vmem %s0, %s460
      %p462 = scmp.lt.s32.totalorder %s26, 1
      %s463 = scalar_select %p462, %s26, 1
      %s464 = smul.addr %s463, 4
      %s465 = smul.addr %s464, 4
      %s466 = scalar_lea.vmem %s1, %s465
      %p467 = scmp.lt.s32.totalorder %s26, 1
      %s468 = scalar_select %p467, %s26, 1
      %s469 = scalar_lea.vmem %s2, %s468
      %p470 = scmp.lt.s32.totalorder %s26, 1
      %s471 = scalar_select %p470, %s26, 1
      %s472 = smul.addr %s471, 4
      %s473 = smul.addr %s472, 4
      %s474 = scalar_lea.vmem %s3, %s473
      %p475 = scmp.lt.s32.totalorder %s26, 1
      %s476 = scalar_select %p475, %s26, 1
      %s477 = smul.addr %s476, 8
      %s478 = scalar_lea.vmem %s4, %s477
      %p479 = scmp.lt.s32.totalorder %s26, 1
      %s480 = scalar_select %p479, %s26, 1
      %s481 = smul.addr %s480, 4
      %s482 = smul.addr %s481, 4
      %s483 = scalar_lea.vmem %s5, %s482
      %p484 = scmp.lt.s32.totalorder %s26, 1
      %s485 = scalar_select %p484, %s26, 1
      %s486 = scalar_lea.vmem %s6, %s485
      %p487 = scmp.lt.s32.totalorder %s26, 1
      %s488 = scalar_select %p487, %s26, 1
      %s489 = smul.addr %s488, 8
      %s490 = smul.addr %s489, 4
      %s491 = scalar_lea.vmem %s7, %s490
      %p492 = scmp.lt.s32.totalorder %s25, 1
      %s493 = scalar_select %p492, %s25, 1
      %s494 = smul.addr %s493, 2
      %s495 = smul.addr %s494, 8
      %s496 = scalar_lea.vmem %s10, %s495
      %p498 = scmp.eq.s32.totalorder %s26, 0
      // Predicated region
      $region61: #{transformer_forward.1} parent=59 // pred_check
        %p499 = pneg %p498
      $region62: #{transformer_forward.1} parent=59 // pred_check_branch
        %501 = sbr.rel (%p499) target = $region64
      $region63: #{transformer_forward.1} parent=59 // pred_region
        %v502 = vld [vmem:[%s461] sm:$0xff]
        %v503 = vld [vmem:[%s461 + $0x8] sm:$0xff]
        %vm504 = vcmask 261120
        %505 = vst.msk [vmem:[#allocation2] sm:$0xff] %vm504, %v502
        %506 = vst.msk [vmem:[#allocation2 + $0x8] sm:$0xff] %vm504, %v503
      $region64: #{transformer_forward.1} parent=59 // pred_fallthru
        _
      %v507 = vld [vmem:[#allocation2] sm:$0xff]
      %v508 = vld [vmem:[#allocation2 + $0x8] sm:$0xff]
      %v509 = vld [vmem:[%s478] sm:$0x3f]
      %vm510 = vcmask 261120
      %v511 = vsel %vm510, %v507, 0.0
      %512 = vadd.xlane.f32.xlu0 %v511
      %v513 = vpop.xlane.xlu0 %512
      %v514 = vsel %vm510, %v508, 0.0
      %515 = vadd.xlane.f32.xlu0 %v514
      %v516 = vpop.xlane.xlu0 %515
      %v517 = vrcp.pop 32.0
      %v518 = vmul.f32 %v513, %v517
      %v519 = vmul.f32 %v516, %v517
      %v520 = vsub.f32 %v507, %v518
      %v521 = vsub.f32 %v508, %v519
      %v522 = vmul.f32 %v520, %v520
      %v523 = vmul.f32 %v521, %v521
      %v524 = vsel %vm510, %v522, 0.0
      %525 = vadd.xlane.f32.xlu0 %v524
      %v526 = vpop.xlane.xlu0 %525
      %v527 = vsel %vm510, %v523, 0.0
      %528 = vadd.xlane.f32.xlu0 %v527
      %v529 = vpop.xlane.xlu0 %528
      %v530 = vmul.f32 %v526, %v517
      %v531 = vmul.f32 %v529, %v517
      %v532 = vadd.f32 %v530, 1e-05
      %v533 = vadd.f32 %v531, 1e-05
      %v534 = vrsqrt.pop %v532
      %v535 = vrsqrt.pop %v533
      %v536 = vmul.f32 %v520, %v534
      %v537 = vmul.f32 %v521, %v535
      %v538 = vlaneseq
      %v539 = vshrl.u32 %v538, 7
      %v540 = vsub.s32 0, %v539
      %v541 = vrot.slane %v509, %v540
      %v542 = vmul.f32 %v536, %v541
      %v543 = vmul.f32 %v537, %v541
      %v544 = vlaneseq
      %v545 = vshrl.u32 %v544, 7
      %v546 = vsub.s32 1, %v545
      %v547 = vrot.slane %v509, %v546
      %v548 = vadd.f32 %v542, %v547
      %v549 = vadd.f32 %v543, %v547
      %v550 = vpack.c.bf16 %v549, %v548
      %v551 = vld [vmem:[%s466] sm:$0xf]
      %v552 = vld [vmem:[%s466 + $0x4] sm:$0xf]
      %v553 = vld [vmem:[%s466 + $0x8] sm:$0xf]
      %v554 = vld [vmem:[%s466 + $0xc] sm:$0xf]
      %v555 = vld [vmem:[%s469] sm:$0x1]
      %v557 = vlaneseq
      %v558 = vshrl.u32 %v557, 7
      %v559 = vsub.s32 0, %v558
      %v560 = vrot.slane %v555, %v559
      %v566 = vunpack.c.l.b16 %v551
      %v567 = vunpack.c.l.b16 %v552
      %v568 = vunpack.c.l.b16 %v553
      %v569 = vunpack.c.l.b16 %v554
      %v570 = vpack.c.b16 %v567, %v566
      %v571 = vpack.c.b16 %v569, %v568
      %v575 = vsel %vm510, %v550, 0
      %577 = vmatprep.subr.bf16.mxu0 0
      %578 = vmatpush1.bf16.msra.mxu0 0
      %579 = vmatprep.subr.bf16.mxu0 0
      %580 = vmatpush1.bf16.msra.mxu0 0
      %581 = vmatprep.subr.bf16.mxu0 0
      %582 = vmatpush1.bf16.msra.mxu0 0
      %583 = vmatprep.subr.bf16.mxu0 0
      %584 = vmatpush1.bf16.msra.mxu0 0
      %585 = vmatprep.subr.bf16.mxu0 0
      %586 = vmatpush1.bf16.msra.mxu0 0
      %587 = vmatprep.subr.bf16.mxu0 0
      %588 = vmatpush1.bf16.msra.mxu0 0
      %589 = vmatprep.subr.bf16.mxu0 0
      %590 = vmatpush1.bf16.msra.mxu0 %v571
      %591 = vmatprep.subr.bf16.mxu0 0
      %592 = vmatpush1.bf16.msra.mxu0 %v570
      %593 = vmatprep.subr.bf16.mxu0 0
      %594 = vmatpush2.bf16.msra.mxu0 0
      %595 = vmatprep.subr.bf16.mxu0 0
      %596 = vmatpush2.bf16.msra.mxu0 0
      %597 = vmatprep.subr.bf16.mxu0 0
      %598 = vmatpush2.bf16.msra.mxu0 0
      %599 = vmatprep.subr.bf16.mxu0 0
      %600 = vmatpush2.bf16.msra.mxu0 0
      %601 = vmatprep.subr.bf16.mxu0 0
      %602 = vmatpush2.bf16.msra.mxu0 0
      %603 = vmatprep.subr.bf16.mxu0 0
      %604 = vmatpush2.bf16.msra.mxu0 0
      %605 = vmatprep.subr.bf16.mxu0 0
      %606 = vmatpush2.bf16.msra.mxu0 0
      %607 = vmatprep.subr.bf16.mxu0 0
      %608 = vmatpush2.bf16.msra.mxu0 0
      %609 = vmatprep.mubr.bf16.mxu0 0
      %610 = vmatmul.mubr.bf16.gmra.mxu0 %v575
      %v611 = vpop.f32.mrf.mxu0
      %v612 = vadd.f32 %v560, %v611
      %v613 = vpop.f32.mrf.mxu0
      %v614 = vpop.f32.mrf.mxu0
      %v615 = vadd.f32 %v560, %v614
      %v616 = vpop.f32.mrf.mxu0
      %617 = vdwg.mxu0
      %v618 = vpack.c.bf16 %v615, %v612
      %620 = vrot.lane.b32.xlu0 %v618, 96
      %v621 = vpop.permute.xlu0 %620
      %vm622 = vcmask 64512
      %v624 = vsel %vm622, %v618, 0
      %v627 = vsel %vm622, %v621, 0
      %629 = vmatprep.subr.bf16.mxu0 0
      %630 = vmatpush1.bf16.xpose.msra.mxu0 0
      %631 = vmatprep.subr.bf16.mxu0 0
      %632 = vmatpush1.bf16.xpose.msra.mxu0 0
      %633 = vmatprep.subr.bf16.mxu0 0
      %634 = vmatpush1.bf16.xpose.msra.mxu0 0
      %635 = vmatprep.subr.bf16.mxu0 0
      %636 = vmatpush1.bf16.xpose.msra.mxu0 0
      %637 = vmatprep.subr.bf16.mxu0 0
      %638 = vmatpush1.bf16.xpose.msra.mxu0 0
      %639 = vmatprep.subr.bf16.mxu0 0
      %640 = vmatpush1.bf16.xpose.msra.mxu0 0
      %641 = vmatprep.subr.bf16.mxu0 0
      %642 = vmatpush1.bf16.xpose.msra.mxu0 0
      %643 = vmatprep.subr.bf16.mxu0 0
      %644 = vmatpush1.bf16.xpose.msra.mxu0 %v627
      %645 = vmatprep.subr.bf16.mxu0 0
      %646 = vmatpush2.bf16.xpose.msra.mxu0 0
      %647 = vmatprep.subr.bf16.mxu0 0
      %648 = vmatpush2.bf16.xpose.msra.mxu0 0
      %649 = vmatprep.subr.bf16.mxu0 0
      %650 = vmatpush2.bf16.xpose.msra.mxu0 0
      %651 = vmatprep.subr.bf16.mxu0 0
      %652 = vmatpush2.bf16.xpose.msra.mxu0 0
      %653 = vmatprep.subr.bf16.mxu0 0
      %654 = vmatpush2.bf16.xpose.msra.mxu0 0
      %655 = vmatprep.subr.bf16.mxu0 0
      %656 = vmatpush2.bf16.xpose.msra.mxu0 0
      %657 = vmatprep.subr.bf16.mxu0 0
      %658 = vmatpush2.bf16.xpose.msra.mxu0 0
      %659 = vmatprep.subr.bf16.mxu0 0
      %660 = vmatpush2.bf16.xpose.msra.mxu0 0
      %661 = vmatprep.mubr.bf16.mxu0 0
      %662 = vmatmul.mubr.bf16.gmra.mxu0 %v624
      %v663 = vpop.f32.mrf.mxu0
      %v664 = vadd.f32 0.0, %v663
      %v665 = vpop.f32.mrf.mxu0
      %v666 = vpop.f32.mrf.mxu0
      %v667 = vadd.f32 0.0, %v666
      %v668 = vpop.f32.mrf.mxu0
      %669 = vdwg.mxu0
      %v670 = vmul.f32 %v664, 0.35355338
      %v671 = vmul.f32 %v667, 0.35355338
      %vm672 = vcmask 130048
      %v673 = vsel %vm672, %v670, -inf
      %674 = vmax.xlane.f32.xlu0 %v673
      %v675 = vpop.xlane.xlu0 %674
      %v676 = vsel %vm672, %v671, -inf
      %677 = vmax.xlane.f32.xlu0 %v676
      %v678 = vpop.xlane.xlu0 %677
      %v679 = vsub.f32 %v670, %v675
      %v680 = vsub.f32 %v671, %v678
      %v681 = vmul.f32 %v679, 1.442695
      %v682 = vpow.pop %v681
      %v683 = vmul.f32 %v680, 1.442695
      %v684 = vpow.pop %v683
      %v685 = vsel %vm672, %v682, 0.0
      %686 = vadd.xlane.f32.xlu0 %v685
      %v687 = vpop.xlane.xlu0 %686
      %v688 = vsel %vm672, %v684, 0.0
      %689 = vadd.xlane.f32.xlu0 %v688
      %v690 = vpop.xlane.xlu0 %689
      %v691 = vrcp.pop %v687
      %v692 = vrcp.pop %v690
      %v693 = vmul.f32 %v682, %v691
      %v694 = vmul.f32 %v684, %v692
      %v695 = vpack.c.bf16 %v694, %v693
      %696 = vrot.lane.b32.xlu0 %v618, 64
      %v697 = vpop.permute.xlu0 %696
      %v700 = vsel %vm672, %v695, 0
      %702 = vmatprep.subr.bf16.mxu0 0
      %703 = vmatpush1.bf16.msra.mxu0 0
      %704 = vmatprep.subr.bf16.mxu0 0
      %705 = vmatpush1.bf16.msra.mxu0 0
      %706 = vmatprep.subr.bf16.mxu0 0
      %707 = vmatpush1.bf16.msra.mxu0 0
      %708 = vmatprep.subr.bf16.mxu0 0
      %709 = vmatpush1.bf16.msra.mxu0 0
      %710 = vmatprep.subr.bf16.mxu0 0
      %711 = vmatpush1.bf16.msra.mxu0 0
      %712 = vmatprep.subr.bf16.mxu0 0
      %713 = vmatpush1.bf16.msra.mxu0 0
      %714 = vmatprep.subr.bf16.mxu0 0
      %715 = vmatpush1.bf16.msra.mxu0 0
      %716 = vmatprep.subr.bf16.mxu0 0
      %717 = vmatpush1.bf16.msra.mxu0 %v697
      %718 = vmatprep.subr.bf16.mxu0 0
      %719 = vmatpush2.bf16.msra.mxu0 0
      %720 = vmatprep.subr.bf16.mxu0 0
      %721 = vmatpush2.bf16.msra.mxu0 0
      %722 = vmatprep.subr.bf16.mxu0 0
      %723 = vmatpush2.bf16.msra.mxu0 0
      %724 = vmatprep.subr.bf16.mxu0 0
      %725 = vmatpush2.bf16.msra.mxu0 0
      %726 = vmatprep.subr.bf16.mxu0 0
      %727 = vmatpush2.bf16.msra.mxu0 0
      %728 = vmatprep.subr.bf16.mxu0 0
      %729 = vmatpush2.bf16.msra.mxu0 0
      %730 = vmatprep.subr.bf16.mxu0 0
      %731 = vmatpush2.bf16.msra.mxu0 0
      %732 = vmatprep.subr.bf16.mxu0 0
      %733 = vmatpush2.bf16.msra.mxu0 0
      %734 = vmatprep.mubr.bf16.mxu0 0
      %735 = vmatmul.mubr.bf16.gmra.mxu0 %v700
      %v736 = vpop.f32.mrf.mxu0
      %v737 = vadd.f32 0.0, %v736
      %v738 = vpop.f32.mrf.mxu0
      %v739 = vpop.f32.mrf.mxu0
      %v740 = vadd.f32 0.0, %v739
      %v741 = vpop.f32.mrf.mxu0
      %742 = vdwg.mxu0
      %743 = vst.msk [vmem:[#allocation3] sm:$0xff] %vm622, %v737
      %744 = vst.msk [vmem:[#allocation3 + $0x8] sm:$0xff] %vm622, %v740
      %745 = vrot.lane.b32.xlu0 %v618, 120
      %v746 = vpop.permute.xlu0 %745
      %747 = vrot.lane.b32.xlu0 %v618, 88
      %v748 = vpop.permute.xlu0 %747
      %v750 = vsel %vm622, %v746, 0
      %v753 = vsel %vm622, %v748, 0
      %755 = vmatprep.subr.bf16.mxu0 0
      %756 = vmatpush1.bf16.xpose.msra.mxu0 0
      %757 = vmatprep.subr.bf16.mxu0 0
      %758 = vmatpush1.bf16.xpose.msra.mxu0 0
      %759 = vmatprep.subr.bf16.mxu0 0
      %760 = vmatpush1.bf16.xpose.msra.mxu0 0
      %761 = vmatprep.subr.bf16.mxu0 0
      %762 = vmatpush1.bf16.xpose.msra.mxu0 0
      %763 = vmatprep.subr.bf16.mxu0 0
      %764 = vmatpush1.bf16.xpose.msra.mxu0 0
      %765 = vmatprep.subr.bf16.mxu0 0
      %766 = vmatpush1.bf16.xpose.msra.mxu0 0
      %767 = vmatprep.subr.bf16.mxu0 0
      %768 = vmatpush1.bf16.xpose.msra.mxu0 0
      %769 = vmatprep.subr.bf16.mxu0 0
      %770 = vmatpush1.bf16.xpose.msra.mxu0 %v753
      %771 = vmatprep.subr.bf16.mxu0 0
      %772 = vmatpush2.bf16.xpose.msra.mxu0 0
      %773 = vmatprep.subr.bf16.mxu0 0
      %774 = vmatpush2.bf16.xpose.msra.mxu0 0
      %775 = vmatprep.subr.bf16.mxu0 0
      %776 = vmatpush2.bf16.xpose.msra.mxu0 0
      %777 = vmatprep.subr.bf16.mxu0 0
      %778 = vmatpush2.bf16.xpose.msra.mxu0 0
      %779 = vmatprep.subr.bf16.mxu0 0
      %780 = vmatpush2.bf16.xpose.msra.mxu0 0
      %781 = vmatprep.subr.bf16.mxu0 0
      %782 = vmatpush2.bf16.xpose.msra.mxu0 0
      %783 = vmatprep.subr.bf16.mxu0 0
      %784 = vmatpush2.bf16.xpose.msra.mxu0 0
      %785 = vmatprep.subr.bf16.mxu0 0
      %786 = vmatpush2.bf16.xpose.msra.mxu0 0
      %787 = vmatprep.mubr.bf16.mxu0 0
      %788 = vmatmul.mubr.bf16.gmra.mxu0 %v750
      %v789 = vpop.f32.mrf.mxu0
      %v790 = vadd.f32 0.0, %v789
      %v791 = vpop.f32.mrf.mxu0
      %v792 = vpop.f32.mrf.mxu0
      %v793 = vadd.f32 0.0, %v792
      %v794 = vpop.f32.mrf.mxu0
      %795 = vdwg.mxu0
      %v796 = vmul.f32 %v790, 0.35355338
      %v797 = vmul.f32 %v793, 0.35355338
      %v798 = vsel %vm672, %v796, -inf
      %799 = vmax.xlane.f32.xlu0 %v798
      %v800 = vpop.xlane.xlu0 %799
      %v801 = vsel %vm672, %v797, -inf
      %802 = vmax.xlane.f32.xlu0 %v801
      %v803 = vpop.xlane.xlu0 %802
      %v804 = vsub.f32 %v796, %v800
      %v805 = vsub.f32 %v797, %v803
      %v806 = vmul.f32 %v804, 1.442695
      %v807 = vpow.pop %v806
      %v808 = vmul.f32 %v805, 1.442695
      %v809 = vpow.pop %v808
      %v810 = vsel %vm672, %v807, 0.0
      %811 = vadd.xlane.f32.xlu0 %v810
      %v812 = vpop.xlane.xlu0 %811
      %v813 = vsel %vm672, %v809, 0.0
      %814 = vadd.xlane.f32.xlu0 %v813
      %v815 = vpop.xlane.xlu0 %814
      %v816 = vrcp.pop %v812
      %v817 = vrcp.pop %v815
      %v818 = vmul.f32 %v807, %v816
      %v819 = vmul.f32 %v809, %v817
      %v820 = vpack.c.bf16 %v819, %v818
      %821 = vrot.lane.b32.xlu0 %v618, 56
      %v822 = vpop.permute.xlu0 %821
      %v825 = vsel %vm672, %v820, 0
      %827 = vmatprep.subr.bf16.mxu0 0
      %828 = vmatpush1.bf16.msra.mxu0 0
      %829 = vmatprep.subr.bf16.mxu0 0
      %830 = vmatpush1.bf16.msra.mxu0 0
      %831 = vmatprep.subr.bf16.mxu0 0
      %832 = vmatpush1.bf16.msra.mxu0 0
      %833 = vmatprep.subr.bf16.mxu0 0
      %834 = vmatpush1.bf16.msra.mxu0 0
      %835 = vmatprep.subr.bf16.mxu0 0
      %836 = vmatpush1.bf16.msra.mxu0 0
      %837 = vmatprep.subr.bf16.mxu0 0
      %838 = vmatpush1.bf16.msra.mxu0 0
      %839 = vmatprep.subr.bf16.mxu0 0
      %840 = vmatpush1.bf16.msra.mxu0 0
      %841 = vmatprep.subr.bf16.mxu0 0
      %842 = vmatpush1.bf16.msra.mxu0 %v822
      %843 = vmatprep.subr.bf16.mxu0 0
      %844 = vmatpush2.bf16.msra.mxu0 0
      %845 = vmatprep.subr.bf16.mxu0 0
      %846 = vmatpush2.bf16.msra.mxu0 0
      %847 = vmatprep.subr.bf16.mxu0 0
      %848 = vmatpush2.bf16.msra.mxu0 0
      %849 = vmatprep.subr.bf16.mxu0 0
      %850 = vmatpush2.bf16.msra.mxu0 0
      %851 = vmatprep.subr.bf16.mxu0 0
      %852 = vmatpush2.bf16.msra.mxu0 0
      %853 = vmatprep.subr.bf16.mxu0 0
      %854 = vmatpush2.bf16.msra.mxu0 0
      %855 = vmatprep.subr.bf16.mxu0 0
      %856 = vmatpush2.bf16.msra.mxu0 0
      %857 = vmatprep.subr.bf16.mxu0 0
      %858 = vmatpush2.bf16.msra.mxu0 0
      %859 = vmatprep.mubr.bf16.mxu0 0
      %860 = vmatmul.mubr.bf16.gmra.mxu0 %v825
      %v861 = vpop.f32.mrf.mxu0
      %v862 = vadd.f32 0.0, %v861
      %v863 = vpop.f32.mrf.mxu0
      %v864 = vpop.f32.mrf.mxu0
      %v865 = vadd.f32 0.0, %v864
      %v866 = vpop.f32.mrf.mxu0
      %867 = vdwg.mxu0
      %870 = vrot.lane.b32.xlu0 %v862, 8
      %v871 = vpop.permute.xlu0 %870
      %872 = vrot.lane.b32.xlu0 %v865, 8
      %v873 = vpop.permute.xlu0 %872
      %vm876 = vcmask 130112
      %877 = vst.msk [vmem:[#allocation3] sm:$0xff] %vm876, %v871
      %878 = vst.msk [vmem:[#allocation3 + $0x8] sm:$0xff] %vm876, %v873
      %879 = vrot.lane.b32.xlu0 %v618, 112
      %v880 = vpop.permute.xlu0 %879
      %881 = vrot.lane.b32.xlu0 %v618, 80
      %v882 = vpop.permute.xlu0 %881
      %v884 = vsel %vm622, %v880, 0
      %v887 = vsel %vm622, %v882, 0
      %889 = vmatprep.subr.bf16.mxu0 0
      %890 = vmatpush1.bf16.xpose.msra.mxu0 0
      %891 = vmatprep.subr.bf16.mxu0 0
      %892 = vmatpush1.bf16.xpose.msra.mxu0 0
      %893 = vmatprep.subr.bf16.mxu0 0
      %894 = vmatpush1.bf16.xpose.msra.mxu0 0
      %895 = vmatprep.subr.bf16.mxu0 0
      %896 = vmatpush1.bf16.xpose.msra.mxu0 0
      %897 = vmatprep.subr.bf16.mxu0 0
      %898 = vmatpush1.bf16.xpose.msra.mxu0 0
      %899 = vmatprep.subr.bf16.mxu0 0
      %900 = vmatpush1.bf16.xpose.msra.mxu0 0
      %901 = vmatprep.subr.bf16.mxu0 0
      %902 = vmatpush1.bf16.xpose.msra.mxu0 0
      %903 = vmatprep.subr.bf16.mxu0 0
      %904 = vmatpush1.bf16.xpose.msra.mxu0 %v887
      %905 = vmatprep.subr.bf16.mxu0 0
      %906 = vmatpush2.bf16.xpose.msra.mxu0 0
      %907 = vmatprep.subr.bf16.mxu0 0
      %908 = vmatpush2.bf16.xpose.msra.mxu0 0
      %909 = vmatprep.subr.bf16.mxu0 0
      %910 = vmatpush2.bf16.xpose.msra.mxu0 0
      %911 = vmatprep.subr.bf16.mxu0 0
      %912 = vmatpush2.bf16.xpose.msra.mxu0 0
      %913 = vmatprep.subr.bf16.mxu0 0
      %914 = vmatpush2.bf16.xpose.msra.mxu0 0
      %915 = vmatprep.subr.bf16.mxu0 0
      %916 = vmatpush2.bf16.xpose.msra.mxu0 0
      %917 = vmatprep.subr.bf16.mxu0 0
      %918 = vmatpush2.bf16.xpose.msra.mxu0 0
      %919 = vmatprep.subr.bf16.mxu0 0
      %920 = vmatpush2.bf16.xpose.msra.mxu0 0
      %921 = vmatprep.mubr.bf16.mxu0 0
      %922 = vmatmul.mubr.bf16.gmra.mxu0 %v884
      %v923 = vpop.f32.mrf.mxu0
      %v924 = vadd.f32 0.0, %v923
      %v925 = vpop.f32.mrf.mxu0
      %v926 = vpop.f32.mrf.mxu0
      %v927 = vadd.f32 0.0, %v926
      %v928 = vpop.f32.mrf.mxu0
      %929 = vdwg.mxu0
      %v930 = vmul.f32 %v924, 0.35355338
      %v931 = vmul.f32 %v927, 0.35355338
      %v932 = vsel %vm672, %v930, -inf
      %933 = vmax.xlane.f32.xlu0 %v932
      %v934 = vpop.xlane.xlu0 %933
      %v935 = vsel %vm672, %v931, -inf
      %936 = vmax.xlane.f32.xlu0 %v935
      %v937 = vpop.xlane.xlu0 %936
      %v938 = vsub.f32 %v930, %v934
      %v939 = vsub.f32 %v931, %v937
      %v940 = vmul.f32 %v938, 1.442695
      %v941 = vpow.pop %v940
      %v942 = vmul.f32 %v939, 1.442695
      %v943 = vpow.pop %v942
      %v944 = vsel %vm672, %v941, 0.0
      %945 = vadd.xlane.f32.xlu0 %v944
      %v946 = vpop.xlane.xlu0 %945
      %v947 = vsel %vm672, %v943, 0.0
      %948 = vadd.xlane.f32.xlu0 %v947
      %v949 = vpop.xlane.xlu0 %948
      %v950 = vrcp.pop %v946
      %v951 = vrcp.pop %v949
      %v952 = vmul.f32 %v941, %v950
      %v953 = vmul.f32 %v943, %v951
      %v954 = vpack.c.bf16 %v953, %v952
      %955 = vrot.lane.b32.xlu0 %v618, 48
      %v956 = vpop.permute.xlu0 %955
      %v959 = vsel %vm672, %v954, 0
      %961 = vmatprep.subr.bf16.mxu0 0
      %962 = vmatpush1.bf16.msra.mxu0 0
      %963 = vmatprep.subr.bf16.mxu0 0
      %964 = vmatpush1.bf16.msra.mxu0 0
      %965 = vmatprep.subr.bf16.mxu0 0
      %966 = vmatpush1.bf16.msra.mxu0 0
      %967 = vmatprep.subr.bf16.mxu0 0
      %968 = vmatpush1.bf16.msra.mxu0 0
      %969 = vmatprep.subr.bf16.mxu0 0
      %970 = vmatpush1.bf16.msra.mxu0 0
      %971 = vmatprep.subr.bf16.mxu0 0
      %972 = vmatpush1.bf16.msra.mxu0 0
      %973 = vmatprep.subr.bf16.mxu0 0
      %974 = vmatpush1.bf16.msra.mxu0 0
      %975 = vmatprep.subr.bf16.mxu0 0
      %976 = vmatpush1.bf16.msra.mxu0 %v956
      %977 = vmatprep.subr.bf16.mxu0 0
      %978 = vmatpush2.bf16.msra.mxu0 0
      %979 = vmatprep.subr.bf16.mxu0 0
      %980 = vmatpush2.bf16.msra.mxu0 0
      %981 = vmatprep.subr.bf16.mxu0 0
      %982 = vmatpush2.bf16.msra.mxu0 0
      %983 = vmatprep.subr.bf16.mxu0 0
      %984 = vmatpush2.bf16.msra.mxu0 0
      %985 = vmatprep.subr.bf16.mxu0 0
      %986 = vmatpush2.bf16.msra.mxu0 0
      %987 = vmatprep.subr.bf16.mxu0 0
      %988 = vmatpush2.bf16.msra.mxu0 0
      %989 = vmatprep.subr.bf16.mxu0 0
      %990 = vmatpush2.bf16.msra.mxu0 0
      %991 = vmatprep.subr.bf16.mxu0 0
      %992 = vmatpush2.bf16.msra.mxu0 0
      %993 = vmatprep.mubr.bf16.mxu0 0
      %994 = vmatmul.mubr.bf16.gmra.mxu0 %v959
      %v995 = vpop.f32.mrf.mxu0
      %v996 = vadd.f32 0.0, %v995
      %v997 = vpop.f32.mrf.mxu0
      %v998 = vpop.f32.mrf.mxu0
      %v999 = vadd.f32 0.0, %v998
      %v1000 = vpop.f32.mrf.mxu0
      %1001 = vdwg.mxu0
      %1004 = vrot.lane.b32.xlu0 %v996, 16
      %v1005 = vpop.permute.xlu0 %1004
      %1006 = vrot.lane.b32.xlu0 %v999, 16
      %v1007 = vpop.permute.xlu0 %1006
      %vm1010 = vcmask 195712
      %1011 = vst.msk [vmem:[#allocation3] sm:$0xff] %vm1010, %v1005
      %1012 = vst.msk [vmem:[#allocation3 + $0x8] sm:$0xff] %vm1010, %v1007
      %1013 = vrot.lane.b32.xlu0 %v618, 104
      %v1014 = vpop.permute.xlu0 %1013
      %1015 = vrot.lane.b32.xlu0 %v618, 72
      %v1016 = vpop.permute.xlu0 %1015
      %v1018 = vsel %vm622, %v1014, 0
      %v1021 = vsel %vm622, %v1016, 0
      %1023 = vmatprep.subr.bf16.mxu0 0
      %1024 = vmatpush1.bf16.xpose.msra.mxu0 0
      %1025 = vmatprep.subr.bf16.mxu0 0
      %1026 = vmatpush1.bf16.xpose.msra.mxu0 0
      %1027 = vmatprep.subr.bf16.mxu0 0
      %1028 = vmatpush1.bf16.xpose.msra.mxu0 0
      %1029 = vmatprep.subr.bf16.mxu0 0
      %1030 = vmatpush1.bf16.xpose.msra.mxu0 0
      %1031 = vmatprep.subr.bf16.mxu0 0
      %1032 = vmatpush1.bf16.xpose.msra.mxu0 0
      %1033 = vmatprep.subr.bf16.mxu0 0
      %1034 = vmatpush1.bf16.xpose.msra.mxu0 0
      %1035 = vmatprep.subr.bf16.mxu0 0
      %1036 = vmatpush1.bf16.xpose.msra.mxu0 0
      %1037 = vmatprep.subr.bf16.mxu0 0
      %1038 = vmatpush1.bf16.xpose.msra.mxu0 %v1021
      %1039 = vmatprep.subr.bf16.mxu0 0
      %1040 = vmatpush2.bf16.xpose.msra.mxu0 0
      %1041 = vmatprep.subr.bf16.mxu0 0
      %1042 = vmatpush2.bf16.xpose.msra.mxu0 0
      %1043 = vmatprep.subr.bf16.mxu0 0
      %1044 = vmatpush2.bf16.xpose.msra.mxu0 0
      %1045 = vmatprep.subr.bf16.mxu0 0
      %1046 = vmatpush2.bf16.xpose.msra.mxu0 0
      %1047 = vmatprep.subr.bf16.mxu0 0
      %1048 = vmatpush2.bf16.xpose.msra.mxu0 0
      %1049 = vmatprep.subr.bf16.mxu0 0
      %1050 = vmatpush2.bf16.xpose.msra.mxu0 0
      %1051 = vmatprep.subr.bf16.mxu0 0
      %1052 = vmatpush2.bf16.xpose.msra.mxu0 0
      %1053 = vmatprep.subr.bf16.mxu0 0
      %1054 = vmatpush2.bf16.xpose.msra.mxu0 0
      %1055 = vmatprep.mubr.bf16.mxu0 0
      %1056 = vmatmul.mubr.bf16.gmra.mxu0 %v1018
      %v1057 = vpop.f32.mrf.mxu0
      %v1058 = vadd.f32 0.0, %v1057
      %v1059 = vpop.f32.mrf.mxu0
      %v1060 = vpop.f32.mrf.mxu0
      %v1061 = vadd.f32 0.0, %v1060
      %v1062 = vpop.f32.mrf.mxu0
      %1063 = vdwg.mxu0
      %v1064 = vmul.f32 %v1058, 0.35355338
      %v1065 = vmul.f32 %v1061, 0.35355338
      %v1066 = vsel %vm672, %v1064, -inf
      %1067 = vmax.xlane.f32.xlu0 %v1066
      %v1068 = vpop.xlane.xlu0 %1067
      %v1069 = vsel %vm672, %v1065, -inf
      %1070 = vmax.xlane.f32.xlu0 %v1069
      %v1071 = vpop.xlane.xlu0 %1070
      %v1072 = vsub.f32 %v1064, %v1068
      %v1073 = vsub.f32 %v1065, %v1071
      %v1074 = vmul.f32 %v1072, 1.442695
      %v1075 = vpow.pop %v1074
      %v1076 = vmul.f32 %v1073, 1.442695
      %v1077 = vpow.pop %v1076
      %v1078 = vsel %vm672, %v1075, 0.0
      %1079 = vadd.xlane.f32.xlu0 %v1078
      %v1080 = vpop.xlane.xlu0 %1079
      %v1081 = vsel %vm672, %v1077, 0.0
      %1082 = vadd.xlane.f32.xlu0 %v1081
      %v1083 = vpop.xlane.xlu0 %1082
      %v1084 = vrcp.pop %v1080
      %v1085 = vrcp.pop %v1083
      %v1086 = vmul.f32 %v1075, %v1084
      %v1087 = vmul.f32 %v1077, %v1085
      %v1088 = vpack.c.bf16 %v1087, %v1086
      %1089 = vrot.lane.b32.xlu0 %v618, 40
      %v1090 = vpop.permute.xlu0 %1089
      %v1093 = vsel %vm672, %v1088, 0
      %1095 = vmatprep.subr.bf16.mxu0 0
      %1096 = vmatpush1.bf16.msra.mxu0 0
      %1097 = vmatprep.subr.bf16.mxu0 0
      %1098 = vmatpush1.bf16.msra.mxu0 0
      %1099 = vmatprep.subr.bf16.mxu0 0
      %1100 = vmatpush1.bf16.msra.mxu0 0
      %1101 = vmatprep.subr.bf16.mxu0 0
      %1102 = vmatpush1.bf16.msra.mxu0 0
      %1103 = vmatprep.subr.bf16.mxu0 0
      %1104 = vmatpush1.bf16.msra.mxu0 0
      %1105 = vmatprep.subr.bf16.mxu0 0
      %1106 = vmatpush1.bf16.msra.mxu0 0
      %1107 = vmatprep.subr.bf16.mxu0 0
      %1108 = vmatpush1.bf16.msra.mxu0 0
      %1109 = vmatprep.subr.bf16.mxu0 0
      %1110 = vmatpush1.bf16.msra.mxu0 %v1090
      %1111 = vmatprep.subr.bf16.mxu0 0
      %1112 = vmatpush2.bf16.msra.mxu0 0
      %1113 = vmatprep.subr.bf16.mxu0 0
      %1114 = vmatpush2.bf16.msra.mxu0 0
      %1115 = vmatprep.subr.bf16.mxu0 0
      %1116 = vmatpush2.bf16.msra.mxu0 0
      %1117 = vmatprep.subr.bf16.mxu0 0
      %1118 = vmatpush2.bf16.msra.mxu0 0
      %1119 = vmatprep.subr.bf16.mxu0 0
      %1120 = vmatpush2.bf16.msra.mxu0 0
      %1121 = vmatprep.subr.bf16.mxu0 0
      %1122 = vmatpush2.bf16.msra.mxu0 0
      %1123 = vmatprep.subr.bf16.mxu0 0
      %1124 = vmatpush2.bf16.msra.mxu0 0
      %1125 = vmatprep.subr.bf16.mxu0 0
      %1126 = vmatpush2.bf16.msra.mxu0 0
      %1127 = vmatprep.mubr.bf16.mxu0 0
      %1128 = vmatmul.mubr.bf16.gmra.mxu0 %v1093
      %v1129 = vpop.f32.mrf.mxu0
      %v1130 = vadd.f32 0.0, %v1129
      %v1131 = vpop.f32.mrf.mxu0
      %v1132 = vpop.f32.mrf.mxu0
      %v1133 = vadd.f32 0.0, %v1132
      %v1134 = vpop.f32.mrf.mxu0
      %1135 = vdwg.mxu0
      %1138 = vrot.lane.b32.xlu0 %v1130, 24
      %v1139 = vpop.permute.xlu0 %1138
      %1140 = vrot.lane.b32.xlu0 %v1133, 24
      %v1141 = vpop.permute.xlu0 %1140
      %vm1144 = vcmask 261312
      %1145 = vst.msk [vmem:[#allocation3] sm:$0xff] %vm1144, %v1139
      %1146 = vst.msk [vmem:[#allocation3 + $0x8] sm:$0xff] %vm1144, %v1141
      %v1147 = vld [vmem:[#allocation3] sm:$0xff]
      %v1148 = vld [vmem:[#allocation3 + $0x8] sm:$0xff]
      %v1149 = vpack.c.bf16 %v1148, %v1147
      %v1150 = vld [vmem:[%s474] sm:$0xf]
      %v1151 = vld [vmem:[%s474 + $0x4] sm:$0xf]
      %v1152 = vld [vmem:[%s474 + $0x8] sm:$0xf]
      %v1153 = vld [vmem:[%s474 + $0xc] sm:$0xf]
      %v1158 = vunpack.c.l.b16 %v1150
      %v1159 = vunpack.c.l.b16 %v1151
      %v1160 = vunpack.c.l.b16 %v1152
      %v1161 = vunpack.c.l.b16 %v1153
      %v1162 = vpack.c.b16 %v1159, %v1158
      %v1163 = vpack.c.b16 %v1161, %v1160
      %v1167 = vsel %vm510, %v1149, 0
      %1169 = vmatprep.subr.bf16.mxu0 0
      %1170 = vmatpush1.bf16.msra.mxu0 0
      %1171 = vmatprep.subr.bf16.mxu0 0
      %1172 = vmatpush1.bf16.msra.mxu0 0
      %1173 = vmatprep.subr.bf16.mxu0 0
      %1174 = vmatpush1.bf16.msra.mxu0 0
      %1175 = vmatprep.subr.bf16.mxu0 0
      %1176 = vmatpush1.bf16.msra.mxu0 0
      %1177 = vmatprep.subr.bf16.mxu0 0
      %1178 = vmatpush1.bf16.msra.mxu0 0
      %1179 = vmatprep.subr.bf16.mxu0 0
      %1180 = vmatpush1.bf16.msra.mxu0 0
      %1181 = vmatprep.subr.bf16.mxu0 0
      %1182 = vmatpush1.bf16.msra.mxu0 %v1163
      %1183 = vmatprep.subr.bf16.mxu0 0
      %1184 = vmatpush1.bf16.msra.mxu0 %v1162
      %1185 = vmatprep.subr.bf16.mxu0 0
      %1186 = vmatpush2.bf16.msra.mxu0 0
      %1187 = vmatprep.subr.bf16.mxu0 0
      %1188 = vmatpush2.bf16.msra.mxu0 0
      %1189 = vmatprep.subr.bf16.mxu0 0
      %1190 = vmatpush2.bf16.msra.mxu0 0
      %1191 = vmatprep.subr.bf16.mxu0 0
      %1192 = vmatpush2.bf16.msra.mxu0 0
      %1193 = vmatprep.subr.bf16.mxu0 0
      %1194 = vmatpush2.bf16.msra.mxu0 0
      %1195 = vmatprep.subr.bf16.mxu0 0
      %1196 = vmatpush2.bf16.msra.mxu0 0
      %1197 = vmatprep.subr.bf16.mxu0 0
      %1198 = vmatpush2.bf16.msra.mxu0 0
      %1199 = vmatprep.subr.bf16.mxu0 0
      %1200 = vmatpush2.bf16.msra.mxu0 0
      %1201 = vmatprep.mubr.bf16.mxu0 0
      %1202 = vmatmul.mubr.bf16.gmra.mxu0 %v1167
      %v1203 = vpop.f32.mrf.mxu0
      %v1204 = vadd.f32 0.0, %v1203
      %v1205 = vpop.f32.mrf.mxu0
      %v1206 = vpop.f32.mrf.mxu0
      %v1207 = vadd.f32 0.0, %v1206
      %v1208 = vpop.f32.mrf.mxu0
      %1209 = vdwg.mxu0
      %v1210 = vadd.f32 %v507, %v1204
      %v1211 = vadd.f32 %v508, %v1207
      %v1212 = vlaneseq
      %v1213 = vshrl.u32 %v1212, 7
      %v1214 = vsub.s32 4, %v1213
      %v1215 = vrot.slane %v509, %v1214
      %v1216 = vadd.f32 %v1210, %v1215
      %v1217 = vadd.f32 %v1211, %v1215
      %v1218 = vsel %vm510, %v1216, 0.0
      %1219 = vadd.xlane.f32.xlu0 %v1218
      %v1220 = vpop.xlane.xlu0 %1219
      %v1221 = vsel %vm510, %v1217, 0.0
      %1222 = vadd.xlane.f32.xlu0 %v1221
      %v1223 = vpop.xlane.xlu0 %1222
      %v1224 = vmul.f32 %v1220, %v517
      %v1225 = vmul.f32 %v1223, %v517
      %v1226 = vsub.f32 %v1216, %v1224
      %v1227 = vsub.f32 %v1217, %v1225
      %v1228 = vmul.f32 %v1226, %v1226
      %v1229 = vmul.f32 %v1227, %v1227
      %v1230 = vsel %vm510, %v1228, 0.0
      %1231 = vadd.xlane.f32.xlu0 %v1230
      %v1232 = vpop.xlane.xlu0 %1231
      %v1233 = vsel %vm510, %v1229, 0.0
      %1234 = vadd.xlane.f32.xlu0 %v1233
      %v1235 = vpop.xlane.xlu0 %1234
      %v1236 = vmul.f32 %v1232, %v517
      %v1237 = vmul.f32 %v1235, %v517
      %v1238 = vadd.f32 %v1236, 1e-05
      %v1239 = vadd.f32 %v1237, 1e-05
      %v1240 = vrsqrt.pop %v1238
      %v1241 = vrsqrt.pop %v1239
      %v1242 = vmul.f32 %v1226, %v1240
      %v1243 = vmul.f32 %v1227, %v1241
      %v1244 = vlaneseq
      %v1245 = vshrl.u32 %v1244, 7
      %v1246 = vsub.s32 2, %v1245
      %v1247 = vrot.slane %v509, %v1246
      %v1248 = vmul.f32 %v1242, %v1247
      %v1249 = vmul.f32 %v1243, %v1247
      %v1250 = vlaneseq
      %v1251 = vshrl.u32 %v1250, 7
      %v1252 = vsub.s32 3, %v1251
      %v1253 = vrot.slane %v509, %v1252
      %v1254 = vadd.f32 %v1248, %v1253
      %v1255 = vadd.f32 %v1249, %v1253
      %v1256 = vpack.c.bf16 %v1255, %v1254
      %v1257 = vld [vmem:[%s483] sm:$0xf]
      %v1258 = vld [vmem:[%s483 + $0x4] sm:$0xf]
      %v1259 = vld [vmem:[%s483 + $0x8] sm:$0xf]
      %v1260 = vld [vmem:[%s483 + $0xc] sm:$0xf]
      %v1261 = vld [vmem:[%s486] sm:$0x1]
      %v1263 = vlaneseq
      %v1264 = vshrl.u32 %v1263, 7
      %v1265 = vsub.s32 0, %v1264
      %v1266 = vrot.slane %v1261, %v1265
      %v1272 = vunpack.c.l.b16 %v1257
      %v1273 = vunpack.c.l.b16 %v1258
      %v1274 = vunpack.c.l.b16 %v1259
      %v1275 = vunpack.c.l.b16 %v1260
      %v1276 = vpack.c.b16 %v1273, %v1272
      %v1277 = vpack.c.b16 %v1275, %v1274
      %v1281 = vsel %vm510, %v1256, 0
      %1283 = vmatprep.subr.bf16.mxu0 0
      %1284 = vmatpush1.bf16.msra.mxu0 0
      %1285 = vmatprep.subr.bf16.mxu0 0
      %1286 = vmatpush1.bf16.msra.mxu0 0
      %1287 = vmatprep.subr.bf16.mxu0 0
      %1288 = vmatpush1.bf16.msra.mxu0 0
      %1289 = vmatprep.subr.bf16.mxu0 0
      %1290 = vmatpush1.bf16.msra.mxu0 0
      %1291 = vmatprep.subr.bf16.mxu0 0
      %1292 = vmatpush1.bf16.msra.mxu0 0
      %1293 = vmatprep.subr.bf16.mxu0 0
      %1294 = vmatpush1.bf16.msra.mxu0 0
      %1295 = vmatprep.subr.bf16.mxu0 0
      %1296 = vmatpush1.bf16.msra.mxu0 %v1277
      %1297 = vmatprep.subr.bf16.mxu0 0
      %1298 = vmatpush1.bf16.msra.mxu0 %v1276
      %1299 = vmatprep.subr.bf16.mxu0 0
      %1300 = vmatpush2.bf16.msra.mxu0 0
      %1301 = vmatprep.subr.bf16.mxu0 0
      %1302 = vmatpush2.bf16.msra.mxu0 0
      %1303 = vmatprep.subr.bf16.mxu0 0
      %1304 = vmatpush2.bf16.msra.mxu0 0
      %1305 = vmatprep.subr.bf16.mxu0 0
      %1306 = vmatpush2.bf16.msra.mxu0 0
      %1307 = vmatprep.subr.bf16.mxu0 0
      %1308 = vmatpush2.bf16.msra.mxu0 0
      %1309 = vmatprep.subr.bf16.mxu0 0
      %1310 = vmatpush2.bf16.msra.mxu0 0
      %1311 = vmatprep.subr.bf16.mxu0 0
      %1312 = vmatpush2.bf16.msra.mxu0 0
      %1313 = vmatprep.subr.bf16.mxu0 0
      %1314 = vmatpush2.bf16.msra.mxu0 0
      %1315 = vmatprep.mubr.bf16.mxu0 0
      %1316 = vmatmul.mubr.bf16.gmra.mxu0 %v1281
      %v1317 = vpop.f32.mrf.mxu0
      %v1318 = vadd.f32 %v1266, %v1317
      %v1319 = vpop.f32.mrf.mxu0
      %v1320 = vpop.f32.mrf.mxu0
      %v1321 = vadd.f32 %v1266, %v1320
      %v1322 = vpop.f32.mrf.mxu0
      %1323 = vdwg.mxu0
      %v1324 = vmax.f32 %v1318, 0.0
      %v1325 = vmax.f32 %v1321, 0.0
      %v1326 = vpack.c.bf16 %v1325, %v1324
      %v1327 = vld [vmem:[%s491] sm:$0xf]
      %v1328 = vld [vmem:[%s491 + $0x4] sm:$0xf]
      %v1329 = vld [vmem:[%s491 + $0x8] sm:$0xf]
      %v1330 = vld [vmem:[%s491 + $0xc] sm:$0xf]
      %v1331 = vld [vmem:[%s491 + $0x10] sm:$0xf]
      %v1332 = vld [vmem:[%s491 + $0x14] sm:$0xf]
      %v1333 = vld [vmem:[%s491 + $0x18] sm:$0xf]
      %v1334 = vld [vmem:[%s491 + $0x1c] sm:$0xf]
      %v1335 = vlaneseq
      %v1336 = vshrl.u32 %v1335, 7
      %v1337 = vsub.s32 5, %v1336
      %v1338 = vrot.slane %v509, %v1337
      %v1347 = vunpack.c.l.b16 %v1327
      %v1348 = vunpack.c.l.b16 %v1328
      %v1349 = vunpack.c.l.b16 %v1329
      %v1350 = vunpack.c.l.b16 %v1330
      %v1351 = vunpack.c.l.b16 %v1331
      %v1352 = vunpack.c.l.b16 %v1332
      %v1353 = vunpack.c.l.b16 %v1333
      %v1354 = vunpack.c.l.b16 %v1334
      %v1355 = vpack.c.b16 %v1348, %v1347
      %v1356 = vpack.c.b16 %v1350, %v1349
      %v1357 = vpack.c.b16 %v1352, %v1351
      %v1358 = vpack.c.b16 %v1354, %v1353
      %vm1363 = vcmask 523264
      %v1365 = vsel %vm1363, %v1326, 0
      %1367 = vmatprep.subr.bf16.mxu0 0
      %1368 = vmatpush1.bf16.msra.mxu0 0
      %1369 = vmatprep.subr.bf16.mxu0 0
      %1370 = vmatpush1.bf16.msra.mxu0 0
      %1371 = vmatprep.subr.bf16.mxu0 0
      %1372 = vmatpush1.bf16.msra.mxu0 0
      %1373 = vmatprep.subr.bf16.mxu0 0
      %1374 = vmatpush1.bf16.msra.mxu0 0
      %1375 = vmatprep.subr.bf16.mxu0 0
      %1376 = vmatpush1.bf16.msra.mxu0 %v1358
      %1377 = vmatprep.subr.bf16.mxu0 0
      %1378 = vmatpush1.bf16.msra.mxu0 %v1357
      %1379 = vmatprep.subr.bf16.mxu0 0
      %1380 = vmatpush1.bf16.msra.mxu0 %v1356
      %1381 = vmatprep.subr.bf16.mxu0 0
      %1382 = vmatpush1.bf16.msra.mxu0 %v1355
      %1383 = vmatprep.subr.bf16.mxu0 0
      %1384 = vmatpush2.bf16.msra.mxu0 0
      %1385 = vmatprep.subr.bf16.mxu0 0
      %1386 = vmatpush2.bf16.msra.mxu0 0
      %1387 = vmatprep.subr.bf16.mxu0 0
      %1388 = vmatpush2.bf16.msra.mxu0 0
      %1389 = vmatprep.subr.bf16.mxu0 0
      %1390 = vmatpush2.bf16.msra.mxu0 0
      %1391 = vmatprep.subr.bf16.mxu0 0
      %1392 = vmatpush2.bf16.msra.mxu0 0
      %1393 = vmatprep.subr.bf16.mxu0 0
      %1394 = vmatpush2.bf16.msra.mxu0 0
      %1395 = vmatprep.subr.bf16.mxu0 0
      %1396 = vmatpush2.bf16.msra.mxu0 0
      %1397 = vmatprep.subr.bf16.mxu0 0
      %1398 = vmatpush2.bf16.msra.mxu0 0
      %1399 = vmatprep.mubr.bf16.mxu0 0
      %1400 = vmatmul.mubr.bf16.gmra.mxu0 %v1365
      %v1401 = vpop.f32.mrf.mxu0
      %v1402 = vadd.f32 %v1338, %v1401
      %v1403 = vpop.f32.mrf.mxu0
      %v1404 = vpop.f32.mrf.mxu0
      %v1405 = vadd.f32 %v1338, %v1404
      %v1406 = vpop.f32.mrf.mxu0
      %1407 = vdwg.mxu0
      %v1408 = vadd.f32 %v1216, %v1402
      %v1409 = vadd.f32 %v1217, %v1405
      %1410 = vst.msk [vmem:[#allocation2] sm:$0xff] %vm510, %v1408
      %1411 = vst.msk [vmem:[#allocation2 + $0x8] sm:$0xff] %vm510, %v1409
      %p1412 = scmp.eq.s32.totalorder %s26, 1
      // Predicated region
      $region65: #{transformer_forward.1} parent=59 // pred_check
        %p1413 = pneg %p1412
      $region66: #{transformer_forward.1} parent=59 // pred_check_branch
        %1415 = sbr.rel (%p1413) target = $region68
      $region67: #{transformer_forward.1} parent=59 // pred_region
        %v1416 = vld [vmem:[#allocation2] sm:$0xff]
        %v1417 = vld [vmem:[#allocation2 + $0x8] sm:$0xff]
        %v1418 = vpack.c.bf16 %v1417, %v1416
        %v1419 = vld [vmem:[%s8] sm:$0xf]
        %v1420 = vld [vmem:[%s8 + $0x4] sm:$0xf]
        %v1421 = vld [vmem:[%s8 + $0x8] sm:$0xf]
        %v1422 = vld [vmem:[%s8 + $0xc] sm:$0xf]
        %v1423 = vld [vmem:[%s9] sm:$0x1]
        %v1425 = vlaneseq
        %v1426 = vshrl.u32 %v1425, 7
        %v1427 = vsub.s32 0, %v1426
        %v1428 = vrot.slane %v1423, %v1427
        %v1434 = vunpack.c.l.b16 %v1419
        %v1435 = vunpack.c.l.b16 %v1420
        %v1436 = vunpack.c.l.b16 %v1421
        %v1437 = vunpack.c.l.b16 %v1422
        %v1438 = vpack.c.b16 %v1435, %v1434
        %v1439 = vpack.c.b16 %v1437, %v1436
        %v1443 = vsel %vm510, %v1418, 0
        %1445 = vmatprep.subr.bf16.mxu0 0
        %1446 = vmatpush1.bf16.msra.mxu0 0
        %1447 = vmatprep.subr.bf16.mxu0 0
        %1448 = vmatpush1.bf16.msra.mxu0 0
        %1449 = vmatprep.subr.bf16.mxu0 0
        %1450 = vmatpush1.bf16.msra.mxu0 0
        %1451 = vmatprep.subr.bf16.mxu0 0
        %1452 = vmatpush1.bf16.msra.mxu0 0
        %1453 = vmatprep.subr.bf16.mxu0 0
        %1454 = vmatpush1.bf16.msra.mxu0 0
        %1455 = vmatprep.subr.bf16.mxu0 0
        %1456 = vmatpush1.bf16.msra.mxu0 0
        %1457 = vmatprep.subr.bf16.mxu0 0
        %1458 = vmatpush1.bf16.msra.mxu0 %v1439
        %1459 = vmatprep.subr.bf16.mxu0 0
        %1460 = vmatpush1.bf16.msra.mxu0 %v1438
        %1461 = vmatprep.subr.bf16.mxu0 0
        %1462 = vmatpush2.bf16.msra.mxu0 0
        %1463 = vmatprep.subr.bf16.mxu0 0
        %1464 = vmatpush2.bf16.msra.mxu0 0
        %1465 = vmatprep.subr.bf16.mxu0 0
        %1466 = vmatpush2.bf16.msra.mxu0 0
        %1467 = vmatprep.subr.bf16.mxu0 0
        %1468 = vmatpush2.bf16.msra.mxu0 0
        %1469 = vmatprep.subr.bf16.mxu0 0
        %1470 = vmatpush2.bf16.msra.mxu0 0
        %1471 = vmatprep.subr.bf16.mxu0 0
        %1472 = vmatpush2.bf16.msra.mxu0 0
        %1473 = vmatprep.subr.bf16.mxu0 0
        %1474 = vmatpush2.bf16.msra.mxu0 0
        %1475 = vmatprep.subr.bf16.mxu0 0
        %1476 = vmatpush2.bf16.msra.mxu0 0
        %1477 = vmatprep.mubr.bf16.mxu0 0
        %1478 = vmatmul.mubr.bf16.gmra.mxu0 %v1443
        %v1479 = vpop.f32.mrf.mxu0
        %v1480 = vadd.f32 %v1428, %v1479
        %v1481 = vpop.f32.mrf.mxu0
        %v1482 = vpop.f32.mrf.mxu0
        %v1483 = vadd.f32 %v1428, %v1482
        %v1484 = vpop.f32.mrf.mxu0
        %1485 = vdwg.mxu0
        %1486 = vst [vmem:[%s496] sm:$0xff] %v1480
        %1487 = vst [vmem:[%s496 + $0x8] sm:$0xff] %v1483
      $region68: #{transformer_forward.1} parent=59 // pred_fallthru
        _
      %p1488 = scmp.lt.s32.totalorder %s25, 1
      %s1489 = scalar_select %p1488, %s25, 1
      %s1490 = smul.addr %s1489, 2
      %s1491 = smul.addr %s1490, 8
      %s1492 = scalar_lea.vmem %s10, %s1491
      // Predicated region
      $region69: #{transformer_forward.1} parent=59 // pred_check
        %p1493 = pneg %p301
      $region70: #{transformer_forward.1} parent=59 // pred_check_branch
        %1495 = sbr.rel (%p1493) target = $region72
      $region71: #{transformer_forward.1} parent=59 // pred_region
        _
      $region72: #{transformer_forward.1} parent=59 // pred_fallthru
        _
    $region60: #{transformer_forward.1} parent=5 // pred_fallthru
      _
    %p1496 = scmp.le.s32.totalorder 2, %s16
    // Predicated region
    $region73: #{transformer_forward.1} parent=5 // pred_check
      %p1497 = pneg %p1496
    $region74: #{transformer_forward.1} parent=5 // pred_check_branch
      %1499 = sbr.rel (%p1497) target = $region76
    $region75: #{transformer_forward.1} parent=5 // pred_region
      %s1500 = ssub.s32 %s16, 2
      // Predicated region
      $region77: #{transformer_forward.1} parent=75 // pred_check
        %p1501 = pneg %p307
      $region78: #{transformer_forward.1} parent=75 // pred_check_branch
        %1503 = sbr.rel (%p1501) target = $region80
      $region79: #{transformer_forward.1} parent=75 // pred_region
        %p1504 = scmp.lt.s32.totalorder %s27, 1
        %s1505 = scalar_select %p1504, %s27, 1
        %s1506 = smul.addr %s1505, 2
        %s1507 = smul.addr %s1506, 8
        %s1508 = scalar_lea.vmem %s10, %s1507
      $region80: #{transformer_forward.1} parent=75 // pred_fallthru
        _
    $region76: #{transformer_forward.1} parent=5 // pred_fallthru
      _
  $region6: #{transformer_forward.1} parent=0 // loop_footer
    %s20 = sadd.s32 1, %s16
  $region7: #{transformer_forward.1} parent=0 // loop_footer_branch
    %15 = sbr.rel target = $region3
  $region8: #{transformer_forward.1} parent=0 // loop_exit
    _

</llo_original>
